<compile_context>
chip_gen: v6e
topology: v6e:2x2x1
jax: 0.10.0
libtpu: 0.0.40
codegen_flags: <defaults>
</compile_context>

<pallas_src>
import math
import jax
import jax.numpy as jnp
from jax.experimental import pallas as pl
from jax.experimental.pallas import tpu as pltpu

BD = math.pi
# NOTE: the PyTorch default boundary_control_type='cube' falls through every
# elif and would raise NameError when used; we default to 'H_net' (any defined
# mode works, semantics per-mode match the PyTorch forward).
BOUNDARY = "H_net"


def _make_kernel(boundary):
    def kernel(x_ref, ix_ref, w1_ref, wh_ref, b_ref, wout_ref, o_ref):
        x = x_ref[...]                                   # (tm, 3)
        b = b_ref[...]                                   # (6, 3m)

        # shared identity embedding, computed once for all 3 fused branches
        s = jnp.dot(x, ix_ref[...], preferred_element_type=jnp.float32)   # (tm, 3m)

        # residual block 1 (fc{br}1, fc{br}2 fused across branches)
        y = jnp.maximum(
            jnp.dot(x, w1_ref[...], preferred_element_type=jnp.float32) + b[0], 0.0)
        y = jnp.maximum(
            jnp.dot(y, wh_ref[0], preferred_element_type=jnp.float32) + b[1], 0.0)
        y = y + s
        # residual block 2 (fc{br}3, fc{br}4)
        s = y
        y = jnp.maximum(
            jnp.dot(y, wh_ref[1], preferred_element_type=jnp.float32) + b[2], 0.0)
        y = jnp.maximum(
            jnp.dot(y, wh_ref[2], preferred_element_type=jnp.float32) + b[3], 0.0)
        y = y + s
        # residual block 3 (fc{br}5, fc{br}6)
        s = y
        y = jnp.maximum(
            jnp.dot(y, wh_ref[3], preferred_element_type=jnp.float32) + b[4], 0.0)
        y = jnp.maximum(
            jnp.dot(y, wh_ref[4], preferred_element_type=jnp.float32) + b[5], 0.0)
        y = y + s

        # fused output heads: block-diagonal (3m, 3) -> (tm, 3) directly
        out = jnp.dot(y, wout_ref[...], preferred_element_type=jnp.float32)

        # boundary control (static branch on the Python string)
        if boundary == "none":
            pass
        elif boundary in ("H_net", "phiH_net"):
            # column br is scaled by x[:, br] * (BD - x[:, br])
            out = out * (x * (BD - x))
        elif boundary in ("E_net", "phiE_net"):
            g = x * (BD - x)                             # (tm, 3)
            factor = jnp.concatenate(
                [g[:, 1:2] * g[:, 2:3],                  # branch 1: g1*g2
                 g[:, 2:3] * g[:, 0:1],                  # branch 2: g2*g0
                 g[:, 0:1] * g[:, 1:2]], axis=1)         # branch 3: g0*g1
            out = out * factor
        else:
            raise ValueError(f"boundary_control_type {boundary!r} not defined")

        o_ref[...] = out                                 # (tm, 3)
    return kernel


def _fuse_params(Ix, W_in, W_h, B, W_out):
    """Fuse the 3 branches: concat first layer / biases, block-diag hidden & head."""
    m = Ix.shape[1]
    f32 = jnp.float32
    Ix3 = jnp.concatenate([Ix, Ix, Ix], axis=1).astype(f32)               # (3, 3m)
    W1 = jnp.concatenate([W_in[0], W_in[1], W_in[2]], axis=1).astype(f32)  # (3, 3m)
    z = jnp.zeros((m, m), f32)
    Wh = jnp.stack([
        jnp.block([[W_h[0, l], z, z],
                   [z, W_h[1, l], z],
                   [z, z, W_h[2, l]]]) for l in range(5)]).astype(f32)     # (5, 3m, 3m)
    Bc = jnp.concatenate(
        [B[0, :, 0, :], B[1, :, 0, :], B[2, :, 0, :]], axis=1).astype(f32)  # (6, 3m)
    Wout = jnp.zeros((3 * m, 3), f32)
    for br in range(3):
        Wout = Wout.at[br * m:(br + 1) * m, br].set(W_out[br, :, 0])       # (3m, 3)
    return Ix3, W1, Wh, Bc, Wout


def relu_resnet_para(x, Ix, W_in, W_h, B, W_out, *, boundary=BOUNDARY, tm=256):
    N, dim = x.shape
    assert dim == 3
    m = Ix.shape[1]
    m3 = 3 * m

    Ix3, W1, Wh, Bc, Wout = _fuse_params(Ix, W_in, W_h, B, W_out)

    # batch tile: multiple of 8, no larger than the (8-rounded) batch
    tm = max(8, min(tm, ((N + 7) // 8) * 8))
    n_blk = pl.cdiv(N, tm)
    Np = n_blk * tm
    x_in = x if Np == N else jnp.pad(x, ((0, Np - N), (0, 0)))

    out = pl.pallas_call(
        _make_kernel(boundary),
        out_shape=jax.ShapeDtypeStruct((Np, 3), jnp.float32),
        grid_spec=pltpu.PrefetchScalarGridSpec(
            num_scalar_prefetch=0,
            grid=(n_blk,),
            in_specs=[
                pl.BlockSpec((tm, 3), lambda i: (i, 0)),             # x
                pl.BlockSpec((3, m3), lambda i: (0, 0)),             # Ix tiled
                pl.BlockSpec((3, m3), lambda i: (0, 0)),             # first layer (concat)
                pl.BlockSpec((5, m3, m3), lambda i: (0, 0, 0)),      # hidden (block-diag)
                pl.BlockSpec((6, m3), lambda i: (0, 0)),             # biases (concat)
                pl.BlockSpec((m3, 3), lambda i: (0, 0)),             # heads (block-diag)
            ],
            out_specs=pl.BlockSpec((tm, 3), lambda i: (i, 0)),
        ),
        compiler_params=pltpu.CompilerParams(
            dimension_semantics=("parallel",)),
    )(x_in, Ix3, W1, Wh, Bc, Wout)
    return out[:N]


def reference(x, Ix, W_in, W_h, B, W_out, boundary=BOUNDARY):
    """Pure-JAX reference mirroring the PyTorch forward (per-branch, un-fused)."""
    outs = []
    for br in range(3):
        s = x @ Ix
        y = jax.nn.relu(x @ W_in[br] + B[br, 0, 0])
        y = jax.nn.relu(y @ W_h[br, 0] + B[br, 1, 0])
        y = y + s
        s = y
        y = jax.nn.relu(y @ W_h[br, 1] + B[br, 2, 0])
        y = jax.nn.relu(y @ W_h[br, 2] + B[br, 3, 0])
        y = y + s
        s = y
        y = jax.nn.relu(y @ W_h[br, 3] + B[br, 4, 0])
        y = jax.nn.relu(y @ W_h[br, 4] + B[br, 5, 0])
        y = y + s
        out = y @ W_out[br]
        if boundary in ("H_net", "phiH_net"):
            c = br
            out = out * (x[:, c:c + 1] * (BD - x[:, c:c + 1]))
        elif boundary in ("E_net", "phiE_net"):
            c1, c2 = [(1, 2), (2, 0), (0, 1)][br]
            out = out * (x[:, c1:c1 + 1] * x[:, c2:c2 + 1]
                         * (BD - x[:, c1:c1 + 1]) * (BD - x[:, c2:c2 + 1]))
        outs.append(out)
    return jnp.concatenate(outs, axis=1)


def init_params(key, m, dim=3):
    """Deterministic PyTorch-Linear-style uniform init (U[-1/sqrt(fan_in), +])."""
    ks = jax.random.split(key, 8)

    def u(k, shape, fan_in):
        b = 1.0 / math.sqrt(fan_in)
        return jax.random.uniform(k, shape, jnp.float32, -b, b)

    W_in = u(ks[0], (3, dim, m), dim)          # fc{1,2,3}1 weights (transposed)
    W_h = u(ks[1], (3, 5, m, m), m)            # fc{i}2..fc{i}6 weights (transposed)
    B_in = u(ks[2], (3, 1, 1, m), dim)         # fc{i}1 biases
    B_h = u(ks[3], (3, 5, 1, m), m)            # fc{i}2..fc{i}6 biases
    B = jnp.concatenate([B_in, B_h], axis=1)   # (3, 6, 1, m)
    W_out = u(ks[4], (3, m, 1), m)             # outlayer{1,2,3} (no bias)
    Ix = jnp.zeros((dim, m), jnp.float32)
    Ix = Ix.at[0, 0].set(1.0).at[1, 1].set(1.0).at[2, 2].set(1.0)
    return Ix, W_in, W_h, B, W_out


if __name__ == "__main__":
    key = jax.random.PRNGKey(0)
    k_x, k_p = jax.random.split(key)

    N, dim, m = 512, 3, 32                      # grid=(2,) at tm=256 -> both TCs on v7x
    x = jax.random.uniform(k_x, (N, dim), jnp.float32, 0.0, BD)
    Ix, W_in, W_h, B, W_out = init_params(k_p, m, dim)

    out = relu_resnet_para(x, Ix, W_in, W_h, B, W_out, tm=256)
    out = jax.block_until_ready(out)

    ref = reference(x, Ix, W_in, W_h, B, W_out)
    assert out.shape == (N, 3)
    assert jnp.allclose(out, ref, atol=1e-4, rtol=1e-5), "mismatch vs reference"

    print("KERNEL_OK")
</pallas_src>

<mosaic_0001>
module attributes {stable_mosaic.version = 11 : i64} {
  func.func @kernel(%arg0: i32, %arg1: memref<256x3xf32, #tpu.memory_space<vmem>>, %arg2: memref<3x96xf32, #tpu.memory_space<vmem>>, %arg3: memref<3x96xf32, #tpu.memory_space<vmem>>, %arg4: memref<5x96x96xf32, #tpu.memory_space<vmem>>, %arg5: memref<6x96xf32, #tpu.memory_space<vmem>>, %arg6: memref<96x3xf32, #tpu.memory_space<vmem>>, %arg7: memref<256x3xf32, #tpu.memory_space<vmem>>) attributes {dimension_semantics = [#tpu.dimension_semantics<parallel>], iteration_bounds = array<i64: 2>, scalar_prefetch = 0 : i64, scratch_operands = 0 : i64, tpu.core_type = #tpu.core_type<tc>, window_params = [{transform_indices = @transform_0, window_bounds = array<i64: 256, 3>}, {pipeline_mode = #tpu.pipeline_mode<synchronous>, transform_indices = @transform_1, window_bounds = array<i64: 3, 96>}, {pipeline_mode = #tpu.pipeline_mode<synchronous>, transform_indices = @transform_2, window_bounds = array<i64: 3, 96>}, {pipeline_mode = #tpu.pipeline_mode<synchronous>, transform_indices = @transform_3, window_bounds = array<i64: 5, 96, 96>}, {pipeline_mode = #tpu.pipeline_mode<synchronous>, transform_indices = @transform_4, window_bounds = array<i64: 6, 96>}, {pipeline_mode = #tpu.pipeline_mode<synchronous>, transform_indices = @transform_5, window_bounds = array<i64: 96, 3>}, {transform_indices = @transform_6, window_bounds = array<i64: 256, 3>}]} {
    %c0 = arith.constant 0 : index
    %c0_0 = arith.constant 0 : index
    %0 = vector.load %arg1[%c0, %c0_0] : memref<256x3xf32, #tpu.memory_space<vmem>>, vector<256x3xf32>
    %c0_1 = arith.constant 0 : index
    %c0_2 = arith.constant 0 : index
    %1 = vector.load %arg5[%c0_1, %c0_2] : memref<6x96xf32, #tpu.memory_space<vmem>>, vector<6x96xf32>
    %c0_3 = arith.constant 0 : index
    %c0_4 = arith.constant 0 : index
    %2 = vector.load %arg2[%c0_3, %c0_4] : memref<3x96xf32, #tpu.memory_space<vmem>>, vector<3x96xf32>
    %cst = arith.constant dense<0.000000e+00> : vector<256x96xf32>
    %3 = tpu.matmul %0, %2, %cst {dimension_numbers = #tpu.dot_dimension_numbers<[1], [0], [0], [1], [0, 0, 1, 1], [], []>} : vector<256x3xf32>, vector<3x96xf32>, vector<256x96xf32> -> vector<256x96xf32>
    %c0_5 = arith.constant 0 : index
    %c0_6 = arith.constant 0 : index
    %4 = vector.load %arg3[%c0_5, %c0_6] : memref<3x96xf32, #tpu.memory_space<vmem>>, vector<3x96xf32>
    %cst_7 = arith.constant dense<0.000000e+00> : vector<256x96xf32>
    %5 = tpu.matmul %0, %4, %cst_7 {dimension_numbers = #tpu.dot_dimension_numbers<[1], [0], [0], [1], [0, 0, 1, 1], [], []>} : vector<256x3xf32>, vector<3x96xf32>, vector<256x96xf32> -> vector<256x96xf32>
    %6 = vector.extract_strided_slice %1 {offsets = [0, 0], sizes = [1, 96], strides = [1, 1]} : vector<6x96xf32> to vector<1x96xf32>
    %7 = vector.shape_cast %6 : vector<1x96xf32> to vector<96xf32>
    %8 = vector.shape_cast %7 : vector<96xf32> to vector<1x96xf32>
    %9 = vector.broadcast %8 : vector<1x96xf32> to vector<256x96xf32>
    %10 = arith.addf %5, %9 : vector<256x96xf32>
    %cst_8 = arith.constant 0.000000e+00 : f32
    %11 = vector.broadcast %cst_8 : f32 to vector<256x96xf32>
    %12 = arith.maximumf %10, %11 : vector<256x96xf32>
    %c0_9 = arith.constant 0 : index
    %c0_10 = arith.constant 0 : index
    %c0_11 = arith.constant 0 : index
    %13 = vector.load %arg4[%c0_9, %c0_10, %c0_11] : memref<5x96x96xf32, #tpu.memory_space<vmem>>, vector<1x96x96xf32>
    %14 = vector.shape_cast %13 : vector<1x96x96xf32> to vector<96x96xf32>
    %cst_12 = arith.constant dense<0.000000e+00> : vector<256x96xf32>
    %15 = tpu.matmul %12, %14, %cst_12 {dimension_numbers = #tpu.dot_dimension_numbers<[1], [0], [0], [1], [0, 0, 1, 1], [], []>} : vector<256x96xf32>, vector<96x96xf32>, vector<256x96xf32> -> vector<256x96xf32>
    %16 = vector.extract_strided_slice %1 {offsets = [1, 0], sizes = [1, 96], strides = [1, 1]} : vector<6x96xf32> to vector<1x96xf32>
    %17 = vector.shape_cast %16 : vector<1x96xf32> to vector<96xf32>
    %18 = vector.shape_cast %17 : vector<96xf32> to vector<1x96xf32>
    %19 = vector.broadcast %18 : vector<1x96xf32> to vector<256x96xf32>
    %20 = arith.addf %15, %19 : vector<256x96xf32>
    %cst_13 = arith.constant 0.000000e+00 : f32
    %21 = vector.broadcast %cst_13 : f32 to vector<256x96xf32>
    %22 = arith.maximumf %20, %21 : vector<256x96xf32>
    %23 = arith.addf %22, %3 : vector<256x96xf32>
    %c1 = arith.constant 1 : index
    %c0_14 = arith.constant 0 : index
    %c0_15 = arith.constant 0 : index
    %24 = vector.load %arg4[%c1, %c0_14, %c0_15] : memref<5x96x96xf32, #tpu.memory_space<vmem>>, vector<1x96x96xf32>
    %25 = vector.shape_cast %24 : vector<1x96x96xf32> to vector<96x96xf32>
    %cst_16 = arith.constant dense<0.000000e+00> : vector<256x96xf32>
    %26 = tpu.matmul %23, %25, %cst_16 {dimension_numbers = #tpu.dot_dimension_numbers<[1], [0], [0], [1], [0, 0, 1, 1], [], []>} : vector<256x96xf32>, vector<96x96xf32>, vector<256x96xf32> -> vector<256x96xf32>
    %27 = vector.extract_strided_slice %1 {offsets = [2, 0], sizes = [1, 96], strides = [1, 1]} : vector<6x96xf32> to vector<1x96xf32>
    %28 = vector.shape_cast %27 : vector<1x96xf32> to vector<96xf32>
    %29 = vector.shape_cast %28 : vector<96xf32> to vector<1x96xf32>
    %30 = vector.broadcast %29 : vector<1x96xf32> to vector<256x96xf32>
    %31 = arith.addf %26, %30 : vector<256x96xf32>
    %cst_17 = arith.constant 0.000000e+00 : f32
    %32 = vector.broadcast %cst_17 : f32 to vector<256x96xf32>
    %33 = arith.maximumf %31, %32 : vector<256x96xf32>
    %c2 = arith.constant 2 : index
    %c0_18 = arith.constant 0 : index
    %c0_19 = arith.constant 0 : index
    %34 = vector.load %arg4[%c2, %c0_18, %c0_19] : memref<5x96x96xf32, #tpu.memory_space<vmem>>, vector<1x96x96xf32>
    %35 = vector.shape_cast %34 : vector<1x96x96xf32> to vector<96x96xf32>
    %cst_20 = arith.constant dense<0.000000e+00> : vector<256x96xf32>
    %36 = tpu.matmul %33, %35, %cst_20 {dimension_numbers = #tpu.dot_dimension_numbers<[1], [0], [0], [1], [0, 0, 1, 1], [], []>} : vector<256x96xf32>, vector<96x96xf32>, vector<256x96xf32> -> vector<256x96xf32>
    %37 = vector.extract_strided_slice %1 {offsets = [3, 0], sizes = [1, 96], strides = [1, 1]} : vector<6x96xf32> to vector<1x96xf32>
    %38 = vector.shape_cast %37 : vector<1x96xf32> to vector<96xf32>
    %39 = vector.shape_cast %38 : vector<96xf32> to vector<1x96xf32>
    %40 = vector.broadcast %39 : vector<1x96xf32> to vector<256x96xf32>
    %41 = arith.addf %36, %40 : vector<256x96xf32>
    %cst_21 = arith.constant 0.000000e+00 : f32
    %42 = vector.broadcast %cst_21 : f32 to vector<256x96xf32>
    %43 = arith.maximumf %41, %42 : vector<256x96xf32>
    %44 = arith.addf %43, %23 : vector<256x96xf32>
    %c3 = arith.constant 3 : index
    %c0_22 = arith.constant 0 : index
    %c0_23 = arith.constant 0 : index
    %45 = vector.load %arg4[%c3, %c0_22, %c0_23] : memref<5x96x96xf32, #tpu.memory_space<vmem>>, vector<1x96x96xf32>
    %46 = vector.shape_cast %45 : vector<1x96x96xf32> to vector<96x96xf32>
    %cst_24 = arith.constant dense<0.000000e+00> : vector<256x96xf32>
    %47 = tpu.matmul %44, %46, %cst_24 {dimension_numbers = #tpu.dot_dimension_numbers<[1], [0], [0], [1], [0, 0, 1, 1], [], []>} : vector<256x96xf32>, vector<96x96xf32>, vector<256x96xf32> -> vector<256x96xf32>
    %48 = vector.extract_strided_slice %1 {offsets = [4, 0], sizes = [1, 96], strides = [1, 1]} : vector<6x96xf32> to vector<1x96xf32>
    %49 = vector.shape_cast %48 : vector<1x96xf32> to vector<96xf32>
    %50 = vector.shape_cast %49 : vector<96xf32> to vector<1x96xf32>
    %51 = vector.broadcast %50 : vector<1x96xf32> to vector<256x96xf32>
    %52 = arith.addf %47, %51 : vector<256x96xf32>
    %cst_25 = arith.constant 0.000000e+00 : f32
    %53 = vector.broadcast %cst_25 : f32 to vector<256x96xf32>
    %54 = arith.maximumf %52, %53 : vector<256x96xf32>
    %c4 = arith.constant 4 : index
    %c0_26 = arith.constant 0 : index
    %c0_27 = arith.constant 0 : index
    %55 = vector.load %arg4[%c4, %c0_26, %c0_27] : memref<5x96x96xf32, #tpu.memory_space<vmem>>, vector<1x96x96xf32>
    %56 = vector.shape_cast %55 : vector<1x96x96xf32> to vector<96x96xf32>
    %cst_28 = arith.constant dense<0.000000e+00> : vector<256x96xf32>
    %57 = tpu.matmul %54, %56, %cst_28 {dimension_numbers = #tpu.dot_dimension_numbers<[1], [0], [0], [1], [0, 0, 1, 1], [], []>} : vector<256x96xf32>, vector<96x96xf32>, vector<256x96xf32> -> vector<256x96xf32>
    %58 = vector.extract_strided_slice %1 {offsets = [5, 0], sizes = [1, 96], strides = [1, 1]} : vector<6x96xf32> to vector<1x96xf32>
    %59 = vector.shape_cast %58 : vector<1x96xf32> to vector<96xf32>
    %60 = vector.shape_cast %59 : vector<96xf32> to vector<1x96xf32>
    %61 = vector.broadcast %60 : vector<1x96xf32> to vector<256x96xf32>
    %62 = arith.addf %57, %61 : vector<256x96xf32>
    %cst_29 = arith.constant 0.000000e+00 : f32
    %63 = vector.broadcast %cst_29 : f32 to vector<256x96xf32>
    %64 = arith.maximumf %62, %63 : vector<256x96xf32>
    %65 = arith.addf %64, %44 : vector<256x96xf32>
    %c0_30 = arith.constant 0 : index
    %c0_31 = arith.constant 0 : index
    %66 = vector.load %arg6[%c0_30, %c0_31] : memref<96x3xf32, #tpu.memory_space<vmem>>, vector<96x3xf32>
    %cst_32 = arith.constant dense<0.000000e+00> : vector<256x3xf32>
    %67 = tpu.matmul %65, %66, %cst_32 {dimension_numbers = #tpu.dot_dimension_numbers<[1], [0], [0], [1], [0, 0, 1, 1], [], []>} : vector<256x96xf32>, vector<96x3xf32>, vector<256x3xf32> -> vector<256x3xf32>
    %cst_33 = arith.constant 3.14159274 : f32
    %68 = vector.broadcast %cst_33 : f32 to vector<256x3xf32>
    %69 = arith.subf %68, %0 : vector<256x3xf32>
    %70 = arith.mulf %0, %69 : vector<256x3xf32>
    %71 = arith.mulf %67, %70 : vector<256x3xf32>
    %c0_34 = arith.constant 0 : index
    %c0_35 = arith.constant 0 : index
    %72 = vector.load %arg7[%c0_34, %c0_35] : memref<256x3xf32, #tpu.memory_space<vmem>>, vector<256x3xf32>
    tpu.vector_store %arg7[%c0_34, %c0_35], %71 {strides = array<i32>} : memref<256x3xf32, #tpu.memory_space<vmem>>, vector<256x3xf32>,
    return
  }
  func.func @transform_0(%arg0: i32) -> (i32, i32) {
    %c0_i32 = arith.constant 0 : i32
    %c0_i32_0 = arith.constant 0 : i32
    return %arg0, %c0_i32 : i32, i32
  }
  func.func @transform_1(%arg0: i32) -> (i32, i32) {
    %c0_i32 = arith.constant 0 : i32
    %c0_i32_0 = arith.constant 0 : i32
    %c0_i32_1 = arith.constant 0 : i32
    return %c0_i32, %c0_i32_0 : i32, i32
  }
  func.func @transform_2(%arg0: i32) -> (i32, i32) {
    %c0_i32 = arith.constant 0 : i32
    %c0_i32_0 = arith.constant 0 : i32
    %c0_i32_1 = arith.constant 0 : i32
    return %c0_i32, %c0_i32_0 : i32, i32
  }
  func.func @transform_3(%arg0: i32) -> (i32, i32, i32) {
    %c0_i32 = arith.constant 0 : i32
    %c0_i32_0 = arith.constant 0 : i32
    %c0_i32_1 = arith.constant 0 : i32
    %c0_i32_2 = arith.constant 0 : i32
    return %c0_i32, %c0_i32_0, %c0_i32_1 : i32, i32, i32
  }
  func.func @transform_4(%arg0: i32) -> (i32, i32) {
    %c0_i32 = arith.constant 0 : i32
    %c0_i32_0 = arith.constant 0 : i32
    %c0_i32_1 = arith.constant 0 : i32
    return %c0_i32, %c0_i32_0 : i32, i32
  }
  func.func @transform_5(%arg0: i32) -> (i32, i32) {
    %c0_i32 = arith.constant 0 : i32
    %c0_i32_0 = arith.constant 0 : i32
    %c0_i32_1 = arith.constant 0 : i32
    return %c0_i32, %c0_i32_0 : i32, i32
  }
  func.func @transform_6(%arg0: i32) -> (i32, i32) {
    %c0_i32 = arith.constant 0 : i32
    %c0_i32_0 = arith.constant 0 : i32
    return %arg0, %c0_i32 : i32, i32
  }
}

</mosaic_0001>

<llo_original>
// kernel: tpu_custom_call.1
$region0: #{tpu_custom_call.1}
  #allocation0 [shape = 'u32[]', space=smem, size = 0x4, offset = 0x4, fixed_abs, tag = 'smem constant byte address 0x4 - core index']
  #allocation1 [shape = 'u32[144,128]{1,0:T(1,128)}', space=vmem, size = 0x12000, scoped, tag = 'internal scratch']
  %s0 = inlined_call_operand.vmem [shape: f32[512,3], index: 0, kind: input, shape index: {}]
  %s1 = inlined_call_operand.vmem [shape: f32[3,96], index: 1, kind: input, shape index: {}]
  %s2 = inlined_call_operand.vmem [shape: f32[3,96], index: 2, kind: input, shape index: {}]
  %s3 = inlined_call_operand.vmem [shape: f32[5,96,96], index: 3, kind: input, shape index: {}]
  %s4 = inlined_call_operand.vmem [shape: f32[6,96], index: 4, kind: input, shape index: {}]
  %s5 = inlined_call_operand.vmem [shape: f32[96,3], index: 5, kind: input, shape index: {}]
  %s6 = inlined_call_operand.vmem [shape: f32[512,3], index: 6, kind: output, shape index: {}]
  %s7 = sld [smem:[#allocation0]]
  $region57: #{tpu_custom_call.1} parent=0
    _
  %s9 = ssub.s32 1, %s7
  %s10 = scalar_select 0, %s9, %s7
  loop: start=0, step=1, limit=4
  $region2: #{tpu_custom_call.1} parent=0 // loop_pre_header
    _
  $region3: #{tpu_custom_call.1} parent=0 // loop_header
    %s12 = sphi 0, %s16
    %p13 = scmp.ge.s32.totalorder %s12, 4
    %s22 = sphi 0, %s24
    %s25 = sphi 0, %s22
    %s26 = sphi 0, %s25
    %s42 = sphi 0, %s26
    %s46 = sphi 0, %s46
    %s48 = sphi 0, %s46
    %s49 = sphi 0, %s48
    %s63 = sphi 0, %s49
    %s67 = sphi 0, %s67
    %s69 = sphi 0, %s67
    %s70 = sphi 0, %s69
    %s84 = sphi 0, %s70
    %s88 = sphi 0, %s88
    %s90 = sphi 0, %s88
    %s91 = sphi 0, %s90
    %s105 = sphi 0, %s91
    %s109 = sphi 0, %s109
    %s111 = sphi 0, %s109
    %s112 = sphi 0, %s111
    %s126 = sphi 0, %s112
    %s130 = sphi 0, %s130
    %s132 = sphi 0, %s130
    %s133 = sphi 0, %s132
    %s147 = sphi 0, %s133
    %s153 = sphi 0, %s155
    %s156 = sphi 0, %s153
    %s157 = sphi 0, %s156
    %s173 = sphi 0, %s157
  $region4: #{tpu_custom_call.1} parent=0 // loop_header_branch
    %15 = sbr.rel (%p13) target = $region8
  $region5: #{tpu_custom_call.1} parent=0 // loop_body
    %s17 = ssub.s32 %s12, 1
    %s18 = ssub.s32 %s12, 2
    %s19 = sadd.s32 %s12, 1
    %s20 = ssub.s32 %s12, %s19
    %p21 = scmp.eq.s32.totalorder %s20, 0
    %s23 = sadd.s32 %s22, 1
    %s24 = scalar_select %p21, %s22, %s23
    %p27 = pneg %p21
    %p28 = scmp.eq.s32.totalorder %s12, 1
    %p29 = por %p27, %p28
    %p30 = scmp.ne.s32.totalorder %s22, %s25
    %p31 = scmp.eq.s32.totalorder %s12, 0
    %p32 = por %p30, %p31
    %p33 = scmp.ne.s32.totalorder %s22, %s25
    %p34 = scmp.eq.s32.totalorder %s17, 1
    %p35 = por %p33, %p34
    %p36 = scmp.ne.s32.totalorder %s25, %s26
    %p37 = scmp.eq.s32.totalorder %s17, 0
    %p38 = por %p36, %p37
    %p39 = scmp.ne.s32.totalorder %s25, %s26
    %p40 = scmp.eq.s32.totalorder %s18, 1
    %p41 = por %p39, %p40
    %p43 = scmp.ne.s32.totalorder %s26, %s42
    %p44 = scmp.eq.s32.totalorder %s18, 0
    %p45 = por %p43, %p44
    %s47 = sadd.s32 %s46, 1
    %p50 = scmp.eq.s32.totalorder %s12, 1
    %p51 = scmp.ne.s32.totalorder %s46, %s48
    %p52 = scmp.eq.s32.totalorder %s12, 0
    %p53 = por %p51, %p52
    %p54 = scmp.ne.s32.totalorder %s46, %s48
    %p55 = scmp.eq.s32.totalorder %s17, 1
    %p56 = por %p54, %p55
    %p57 = scmp.ne.s32.totalorder %s48, %s49
    %p58 = scmp.eq.s32.totalorder %s17, 0
    %p59 = por %p57, %p58
    %p60 = scmp.ne.s32.totalorder %s48, %s49
    %p61 = scmp.eq.s32.totalorder %s18, 1
    %p62 = por %p60, %p61
    %p64 = scmp.ne.s32.totalorder %s49, %s63
    %p65 = scmp.eq.s32.totalorder %s18, 0
    %p66 = por %p64, %p65
    %s68 = sadd.s32 %s67, 1
    %p71 = scmp.eq.s32.totalorder %s12, 1
    %p72 = scmp.ne.s32.totalorder %s67, %s69
    %p73 = scmp.eq.s32.totalorder %s12, 0
    %p74 = por %p72, %p73
    %p75 = scmp.ne.s32.totalorder %s67, %s69
    %p76 = scmp.eq.s32.totalorder %s17, 1
    %p77 = por %p75, %p76
    %p78 = scmp.ne.s32.totalorder %s69, %s70
    %p79 = scmp.eq.s32.totalorder %s17, 0
    %p80 = por %p78, %p79
    %p81 = scmp.ne.s32.totalorder %s69, %s70
    %p82 = scmp.eq.s32.totalorder %s18, 1
    %p83 = por %p81, %p82
    %p85 = scmp.ne.s32.totalorder %s70, %s84
    %p86 = scmp.eq.s32.totalorder %s18, 0
    %p87 = por %p85, %p86
    %s89 = sadd.s32 %s88, 1
    %p92 = scmp.eq.s32.totalorder %s12, 1
    %p93 = scmp.ne.s32.totalorder %s88, %s90
    %p94 = scmp.eq.s32.totalorder %s12, 0
    %p95 = por %p93, %p94
    %p96 = scmp.ne.s32.totalorder %s88, %s90
    %p97 = scmp.eq.s32.totalorder %s17, 1
    %p98 = por %p96, %p97
    %p99 = scmp.ne.s32.totalorder %s90, %s91
    %p100 = scmp.eq.s32.totalorder %s17, 0
    %p101 = por %p99, %p100
    %p102 = scmp.ne.s32.totalorder %s90, %s91
    %p103 = scmp.eq.s32.totalorder %s18, 1
    %p104 = por %p102, %p103
    %p106 = scmp.ne.s32.totalorder %s91, %s105
    %p107 = scmp.eq.s32.totalorder %s18, 0
    %p108 = por %p106, %p107
    %s110 = sadd.s32 %s109, 1
    %p113 = scmp.eq.s32.totalorder %s12, 1
    %p114 = scmp.ne.s32.totalorder %s109, %s111
    %p115 = scmp.eq.s32.totalorder %s12, 0
    %p116 = por %p114, %p115
    %p117 = scmp.ne.s32.totalorder %s109, %s111
    %p118 = scmp.eq.s32.totalorder %s17, 1
    %p119 = por %p117, %p118
    %p120 = scmp.ne.s32.totalorder %s111, %s112
    %p121 = scmp.eq.s32.totalorder %s17, 0
    %p122 = por %p120, %p121
    %p123 = scmp.ne.s32.totalorder %s111, %s112
    %p124 = scmp.eq.s32.totalorder %s18, 1
    %p125 = por %p123, %p124
    %p127 = scmp.ne.s32.totalorder %s112, %s126
    %p128 = scmp.eq.s32.totalorder %s18, 0
    %p129 = por %p127, %p128
    %s131 = sadd.s32 %s130, 1
    %p134 = scmp.eq.s32.totalorder %s12, 1
    %p135 = scmp.ne.s32.totalorder %s130, %s132
    %p136 = scmp.eq.s32.totalorder %s12, 0
    %p137 = por %p135, %p136
    %p138 = scmp.ne.s32.totalorder %s130, %s132
    %p139 = scmp.eq.s32.totalorder %s17, 1
    %p140 = por %p138, %p139
    %p141 = scmp.ne.s32.totalorder %s132, %s133
    %p142 = scmp.eq.s32.totalorder %s17, 0
    %p143 = por %p141, %p142
    %p144 = scmp.ne.s32.totalorder %s132, %s133
    %p145 = scmp.eq.s32.totalorder %s18, 1
    %p146 = por %p144, %p145
    %p148 = scmp.ne.s32.totalorder %s133, %s147
    %p149 = scmp.eq.s32.totalorder %s18, 0
    %p150 = por %p148, %p149
    %s151 = ssub.s32 %s12, %s19
    %p152 = scmp.eq.s32.totalorder %s151, 0
    %s154 = sadd.s32 %s153, 1
    %s155 = scalar_select %p152, %s153, %s154
    %p158 = pneg %p152
    %p159 = scmp.eq.s32.totalorder %s12, 1
    %p160 = por %p158, %p159
    %p161 = scmp.ne.s32.totalorder %s153, %s156
    %p162 = scmp.eq.s32.totalorder %s12, 0
    %p163 = por %p161, %p162
    %p164 = scmp.ne.s32.totalorder %s153, %s156
    %p165 = scmp.eq.s32.totalorder %s17, 1
    %p166 = por %p164, %p165
    %p167 = scmp.ne.s32.totalorder %s156, %s157
    %p168 = scmp.eq.s32.totalorder %s17, 0
    %p169 = por %p167, %p168
    %p170 = scmp.ne.s32.totalorder %s156, %s157
    %p171 = scmp.eq.s32.totalorder %s18, 1
    %p172 = por %p170, %p171
    %p174 = scmp.ne.s32.totalorder %s157, %s173
    %p175 = scmp.eq.s32.totalorder %s18, 0
    %p176 = por %p174, %p175
    %p177 = scmp.le.s32.totalorder 1, %s12
    %p178 = scmp.lt.s32.totalorder %s12, 3
    %p179 = pnand %p177, %p178
    %p180 = pneg %p179
    // Predicated region
    $region9: #{tpu_custom_call.1} parent=5 // pred_check
      _
    $region10: #{tpu_custom_call.1} parent=5 // pred_check_branch
      %182 = sbr.rel (%p179) target = $region12
    $region11: #{tpu_custom_call.1} parent=5 // pred_region
      %s183 = ssub.s32 %s12, 1
      // Predicated region
      $region13: #{tpu_custom_call.1} parent=11 // pred_check
        %p184 = pneg %p59
      $region14: #{tpu_custom_call.1} parent=11 // pred_check_branch
        %186 = sbr.rel (%p184) target = $region16
      $region15: #{tpu_custom_call.1} parent=11 // pred_region
        _
      $region16: #{tpu_custom_call.1} parent=11 // pred_fallthru
        _
      // Predicated region
      $region17: #{tpu_custom_call.1} parent=11 // pred_check
        %p187 = pneg %p80
      $region18: #{tpu_custom_call.1} parent=11 // pred_check_branch
        %189 = sbr.rel (%p187) target = $region20
      $region19: #{tpu_custom_call.1} parent=11 // pred_region
        _
      $region20: #{tpu_custom_call.1} parent=11 // pred_fallthru
        _
      // Predicated region
      $region21: #{tpu_custom_call.1} parent=11 // pred_check
        %p190 = pneg %p101
      $region22: #{tpu_custom_call.1} parent=11 // pred_check_branch
        %192 = sbr.rel (%p190) target = $region24
      $region23: #{tpu_custom_call.1} parent=11 // pred_region
        _
      $region24: #{tpu_custom_call.1} parent=11 // pred_fallthru
        _
      // Predicated region
      $region25: #{tpu_custom_call.1} parent=11 // pred_check
        %p193 = pneg %p122
      $region26: #{tpu_custom_call.1} parent=11 // pred_check_branch
        %195 = sbr.rel (%p193) target = $region28
      $region27: #{tpu_custom_call.1} parent=11 // pred_region
        _
      $region28: #{tpu_custom_call.1} parent=11 // pred_fallthru
        _
      // Predicated region
      $region29: #{tpu_custom_call.1} parent=11 // pred_check
        %p196 = pneg %p143
      $region30: #{tpu_custom_call.1} parent=11 // pred_check_branch
        %198 = sbr.rel (%p196) target = $region32
      $region31: #{tpu_custom_call.1} parent=11 // pred_region
        _
      $region32: #{tpu_custom_call.1} parent=11 // pred_fallthru
        _
    $region12: #{tpu_custom_call.1} parent=5 // pred_fallthru
      _
    %p199 = scmp.lt.s32.totalorder %s12, 2
    // Predicated region
    $region33: #{tpu_custom_call.1} parent=5 // pred_check
      %p200 = pneg %p199
    $region34: #{tpu_custom_call.1} parent=5 // pred_check_branch
      %202 = sbr.rel (%p200) target = $region36
    $region35: #{tpu_custom_call.1} parent=5 // pred_region
      // Predicated region
      $region37: #{tpu_custom_call.1} parent=35 // pred_check
        %p203 = pneg %p32
      $region38: #{tpu_custom_call.1} parent=35 // pred_check_branch
        %205 = sbr.rel (%p203) target = $region40
      $region39: #{tpu_custom_call.1} parent=35 // pred_region
        %s206 = smul.u32 32, %s12
        %p207 = scmp.lt.s32.totalorder %s206, 63
        %s208 = scalar_select %p207, %s206, 63
        %s209 = smul.addr %s208, 8
        %s210 = scalar_lea.vmem %s0, %s209
        %s211 = smul.u32 32, %s12
      $region40: #{tpu_custom_call.1} parent=35 // pred_fallthru
        _
    $region36: #{tpu_custom_call.1} parent=5 // pred_fallthru
      _
    %p212 = scmp.le.s32.totalorder 1, %s12
    %p213 = scmp.lt.s32.totalorder %s12, 3
    %p214 = pnand %p212, %p213
    %p215 = pneg %p214
    // Predicated region
    $region41: #{tpu_custom_call.1} parent=5 // pred_check
      _
    $region42: #{tpu_custom_call.1} parent=5 // pred_check_branch
      %217 = sbr.rel (%p214) target = $region44
    $region43: #{tpu_custom_call.1} parent=5 // pred_region
      %s218 = ssub.s32 %s12, 1
      %s219 = smul.u32 32, %s17
      %p220 = scmp.lt.s32.totalorder %s219, 63
      %s221 = scalar_select %p220, %s219, 63
      %s222 = smul.addr %s221, 8
      %s223 = scalar_lea.vmem %s0, %s222
      %p224 = pneg %p38
      %p225 = pneg %p35
      %p226 = pneg %p59
      %p227 = pneg %p56
      %p228 = pneg %p80
      %p229 = pneg %p77
      %p230 = pneg %p101
      %p231 = pneg %p98
      %p232 = pneg %p122
      %p233 = pneg %p119
      %p234 = pneg %p143
      %p235 = pneg %p140
      %p236 = pneg %p169
      %p237 = pneg %p166
      %s238 = smul.u32 32, %s17
      %p239 = scmp.lt.s32.totalorder %s238, 63
      %s240 = scalar_select %p239, %s238, 63
      %s241 = smul.addr %s240, 8
      %s242 = scalar_lea.vmem %s6, %s241
      %s243 = smul.u32 32, %s17
      %p244 = scmp.lt.s32.totalorder %s243, 63
      %s245 = scalar_select %p244, %s243, 63
      %s246 = smul.addr %s245, 8
      %s247 = scalar_lea.vmem %s0, %s246
      %s248 = smul.u32 32, %s17
      %s249 = smul.u32 32, %s17
      %p250 = scmp.lt.s32.totalorder %s249, 63
      %s251 = scalar_select %p250, %s249, 63
      %s252 = smul.addr %s251, 8
      %s253 = scalar_lea.vmem %s6, %s252
      %s254 = smul.u32 32, %s17
      %v255 = vld [vmem:[%s247] sm:$0xff]
      %v256 = vld [vmem:[%s247 + $0x8] sm:$0xff]
      %v257 = vld [vmem:[%s247 + $0x10] sm:$0xff]
      %v258 = vld [vmem:[%s247 + $0x18] sm:$0xff]
      %v259 = vld [vmem:[%s247 + $0x20] sm:$0xff]
      %v260 = vld [vmem:[%s247 + $0x28] sm:$0xff]
      %v261 = vld [vmem:[%s247 + $0x30] sm:$0xff]
      %v262 = vld [vmem:[%s247 + $0x38] sm:$0xff]
      %v263 = vld [vmem:[%s247 + $0x40] sm:$0xff]
      %v264 = vld [vmem:[%s247 + $0x48] sm:$0xff]
      %v265 = vld [vmem:[%s247 + $0x50] sm:$0xff]
      %v266 = vld [vmem:[%s247 + $0x58] sm:$0xff]
      %v267 = vld [vmem:[%s247 + $0x60] sm:$0xff]
      %v268 = vld [vmem:[%s247 + $0x68] sm:$0xff]
      %v269 = vld [vmem:[%s247 + $0x70] sm:$0xff]
      %v270 = vld [vmem:[%s247 + $0x78] sm:$0xff]
      %v271 = vld [vmem:[%s247 + $0x80] sm:$0xff]
      %v272 = vld [vmem:[%s247 + $0x88] sm:$0xff]
      %v273 = vld [vmem:[%s247 + $0x90] sm:$0xff]
      %v274 = vld [vmem:[%s247 + $0x98] sm:$0xff]
      %v275 = vld [vmem:[%s247 + $0xa0] sm:$0xff]
      %v276 = vld [vmem:[%s247 + $0xa8] sm:$0xff]
      %v277 = vld [vmem:[%s247 + $0xb0] sm:$0xff]
      %v278 = vld [vmem:[%s247 + $0xb8] sm:$0xff]
      %v279 = vld [vmem:[%s247 + $0xc0] sm:$0xff]
      %v280 = vld [vmem:[%s247 + $0xc8] sm:$0xff]
      %v281 = vld [vmem:[%s247 + $0xd0] sm:$0xff]
      %v282 = vld [vmem:[%s247 + $0xd8] sm:$0xff]
      %v283 = vld [vmem:[%s247 + $0xe0] sm:$0xff]
      %v284 = vld [vmem:[%s247 + $0xe8] sm:$0xff]
      %v285 = vld [vmem:[%s247 + $0xf0] sm:$0xff]
      %v286 = vld [vmem:[%s247 + $0xf8] sm:$0xff]
      %v287 = vld [vmem:[%s4] sm:$0x3f]
      %v288 = vld [vmem:[%s1] sm:$0x7]
      %vm289 = vcmask 23552
      %v291 = vsel %vm289, %v255, 0
      %v294 = vsel %vm289, %v256, 0
      %v297 = vsel %vm289, %v257, 0
      %v300 = vsel %vm289, %v258, 0
      %v303 = vsel %vm289, %v259, 0
      %v306 = vsel %vm289, %v260, 0
      %v309 = vsel %vm289, %v261, 0
      %v312 = vsel %vm289, %v262, 0
      %v315 = vsel %vm289, %v263, 0
      %v318 = vsel %vm289, %v264, 0
      %v321 = vsel %vm289, %v265, 0
      %v324 = vsel %vm289, %v266, 0
      %v327 = vsel %vm289, %v267, 0
      %v330 = vsel %vm289, %v268, 0
      %v333 = vsel %vm289, %v269, 0
      %v336 = vsel %vm289, %v270, 0
      %v339 = vsel %vm289, %v271, 0
      %v342 = vsel %vm289, %v272, 0
      %v345 = vsel %vm289, %v273, 0
      %v348 = vsel %vm289, %v274, 0
      %v351 = vsel %vm289, %v275, 0
      %v354 = vsel %vm289, %v276, 0
      %v357 = vsel %vm289, %v277, 0
      %v360 = vsel %vm289, %v278, 0
      %v363 = vsel %vm289, %v279, 0
      %v366 = vsel %vm289, %v280, 0
      %v369 = vsel %vm289, %v281, 0
      %v372 = vsel %vm289, %v282, 0
      %v375 = vsel %vm289, %v283, 0
      %v378 = vsel %vm289, %v284, 0
      %v381 = vsel %vm289, %v285, 0
      %v384 = vsel %vm289, %v286, 0
      %vm386 = vcmask 1042432
      %v388 = vsel %vm386, %v288, 0
      %390 = vmatprep.subr.mxu0 0.0
      %391 = vmatpush1.msra.mxu0 0.0
      %392 = vmatprep.subr.mxu0 0.0
      %393 = vmatpush1.msra.mxu0 0.0
      %394 = vmatprep.subr.mxu0 0.0
      %395 = vmatpush1.msra.mxu0 0.0
      %396 = vmatprep.subr.mxu0 0.0
      %397 = vmatpush1.msra.mxu0 0.0
      %398 = vmatprep.subr.mxu0 0.0
      %399 = vmatpush1.msra.mxu0 0.0
      %400 = vmatprep.subr.mxu0 0.0
      %401 = vmatpush1.msra.mxu0 0.0
      %402 = vmatprep.subr.mxu0 0.0
      %403 = vmatpush1.msra.mxu0 0.0
      %404 = vmatprep.subr.mxu0 0.0
      %405 = vmatpush1.msra.mxu0 0.0
      %406 = vmatprep.subr.mxu0 0.0
      %407 = vmatpush1.msra.mxu0 0.0
      %408 = vmatprep.subr.mxu0 0.0
      %409 = vmatpush1.msra.mxu0 0.0
      %410 = vmatprep.subr.mxu0 0.0
      %411 = vmatpush1.msra.mxu0 0.0
      %412 = vmatprep.subr.mxu0 0.0
      %413 = vmatpush1.msra.mxu0 0.0
      %414 = vmatprep.subr.mxu0 0.0
      %415 = vmatpush1.msra.mxu0 0.0
      %416 = vmatprep.subr.mxu0 0.0
      %417 = vmatpush1.msra.mxu0 0.0
      %418 = vmatprep.subr.mxu0 0.0
      %419 = vmatpush1.msra.mxu0 0.0
      %420 = vmatprep.subr.mxu0 0.0
      %421 = vmatpush1.msra.mxu0 %v388
      %422 = vmatprep.subr.mxu0 0.0
      %423 = vmatpush2.msra.mxu0 0.0
      %424 = vmatprep.subr.mxu0 0.0
      %425 = vmatpush2.msra.mxu0 0.0
      %426 = vmatprep.subr.mxu0 0.0
      %427 = vmatpush2.msra.mxu0 0.0
      %428 = vmatprep.subr.mxu0 0.0
      %429 = vmatpush2.msra.mxu0 0.0
      %430 = vmatprep.subr.mxu0 0.0
      %431 = vmatpush2.msra.mxu0 0.0
      %432 = vmatprep.subr.mxu0 0.0
      %433 = vmatpush2.msra.mxu0 0.0
      %434 = vmatprep.subr.mxu0 0.0
      %435 = vmatpush2.msra.mxu0 0.0
      %436 = vmatprep.subr.mxu0 0.0
      %437 = vmatpush2.msra.mxu0 0.0
      %438 = vmatprep.subr.mxu0 0.0
      %439 = vmatpush2.msra.mxu0 0.0
      %440 = vmatprep.subr.mxu0 0.0
      %441 = vmatpush2.msra.mxu0 0.0
      %442 = vmatprep.subr.mxu0 0.0
      %443 = vmatpush2.msra.mxu0 0.0
      %444 = vmatprep.subr.mxu0 0.0
      %445 = vmatpush2.msra.mxu0 0.0
      %446 = vmatprep.subr.mxu0 0.0
      %447 = vmatpush2.msra.mxu0 0.0
      %448 = vmatprep.subr.mxu0 0.0
      %449 = vmatpush2.msra.mxu0 0.0
      %450 = vmatprep.subr.mxu0 0.0
      %451 = vmatpush2.msra.mxu0 0.0
      %452 = vmatprep.subr.mxu0 0.0
      %453 = vmatpush2.msra.mxu0 0.0
      %454 = vmatprep.mubr.f32.mxu0 0.0
      %455 = vmatmul.mubr.f32.gmra.mxu0 %v291
      %v456 = vpop.f32.mrf.mxu0
      %v457 = vadd.f32 0.0, %v456
      %v458 = vpop.f32.mrf.mxu0
      %459 = vmatprep.mubr.f32.mxu0 0.0
      %460 = vmatmul.mubr.f32.gmra.mxu0 %v294
      %v461 = vpop.f32.mrf.mxu0
      %v462 = vadd.f32 0.0, %v461
      %v463 = vpop.f32.mrf.mxu0
      %464 = vmatprep.mubr.f32.mxu0 0.0
      %465 = vmatmul.mubr.f32.gmra.mxu0 %v297
      %v466 = vpop.f32.mrf.mxu0
      %v467 = vadd.f32 0.0, %v466
      %v468 = vpop.f32.mrf.mxu0
      %469 = vmatprep.mubr.f32.mxu0 0.0
      %470 = vmatmul.mubr.f32.gmra.mxu0 %v300
      %v471 = vpop.f32.mrf.mxu0
      %v472 = vadd.f32 0.0, %v471
      %v473 = vpop.f32.mrf.mxu0
      %474 = vmatprep.mubr.f32.mxu0 0.0
      %475 = vmatmul.mubr.f32.gmra.mxu0 %v303
      %v476 = vpop.f32.mrf.mxu0
      %v477 = vadd.f32 0.0, %v476
      %v478 = vpop.f32.mrf.mxu0
      %479 = vmatprep.mubr.f32.mxu0 0.0
      %480 = vmatmul.mubr.f32.gmra.mxu0 %v306
      %v481 = vpop.f32.mrf.mxu0
      %v482 = vadd.f32 0.0, %v481
      %v483 = vpop.f32.mrf.mxu0
      %484 = vmatprep.mubr.f32.mxu0 0.0
      %485 = vmatmul.mubr.f32.gmra.mxu0 %v309
      %v486 = vpop.f32.mrf.mxu0
      %v487 = vadd.f32 0.0, %v486
      %v488 = vpop.f32.mrf.mxu0
      %489 = vmatprep.mubr.f32.mxu0 0.0
      %490 = vmatmul.mubr.f32.gmra.mxu0 %v312
      %v491 = vpop.f32.mrf.mxu0
      %v492 = vadd.f32 0.0, %v491
      %v493 = vpop.f32.mrf.mxu0
      %494 = vmatprep.mubr.f32.mxu0 0.0
      %495 = vmatmul.mubr.f32.gmra.mxu0 %v315
      %v496 = vpop.f32.mrf.mxu0
      %v497 = vadd.f32 0.0, %v496
      %v498 = vpop.f32.mrf.mxu0
      %499 = vmatprep.mubr.f32.mxu0 0.0
      %500 = vmatmul.mubr.f32.gmra.mxu0 %v318
      %v501 = vpop.f32.mrf.mxu0
      %v502 = vadd.f32 0.0, %v501
      %v503 = vpop.f32.mrf.mxu0
      %504 = vmatprep.mubr.f32.mxu0 0.0
      %505 = vmatmul.mubr.f32.gmra.mxu0 %v321
      %v506 = vpop.f32.mrf.mxu0
      %v507 = vadd.f32 0.0, %v506
      %v508 = vpop.f32.mrf.mxu0
      %509 = vmatprep.mubr.f32.mxu0 0.0
      %510 = vmatmul.mubr.f32.gmra.mxu0 %v324
      %v511 = vpop.f32.mrf.mxu0
      %v512 = vadd.f32 0.0, %v511
      %v513 = vpop.f32.mrf.mxu0
      %514 = vmatprep.mubr.f32.mxu0 0.0
      %515 = vmatmul.mubr.f32.gmra.mxu0 %v327
      %v516 = vpop.f32.mrf.mxu0
      %v517 = vadd.f32 0.0, %v516
      %v518 = vpop.f32.mrf.mxu0
      %519 = vmatprep.mubr.f32.mxu0 0.0
      %520 = vmatmul.mubr.f32.gmra.mxu0 %v330
      %v521 = vpop.f32.mrf.mxu0
      %v522 = vadd.f32 0.0, %v521
      %v523 = vpop.f32.mrf.mxu0
      %524 = vmatprep.mubr.f32.mxu0 0.0
      %525 = vmatmul.mubr.f32.gmra.mxu0 %v333
      %v526 = vpop.f32.mrf.mxu0
      %v527 = vadd.f32 0.0, %v526
      %v528 = vpop.f32.mrf.mxu0
      %529 = vmatprep.mubr.f32.mxu0 0.0
      %530 = vmatmul.mubr.f32.gmra.mxu0 %v336
      %v531 = vpop.f32.mrf.mxu0
      %v532 = vadd.f32 0.0, %v531
      %v533 = vpop.f32.mrf.mxu0
      %534 = vmatprep.mubr.f32.mxu0 0.0
      %535 = vmatmul.mubr.f32.gmra.mxu0 %v339
      %v536 = vpop.f32.mrf.mxu0
      %v537 = vadd.f32 0.0, %v536
      %v538 = vpop.f32.mrf.mxu0
      %539 = vmatprep.mubr.f32.mxu0 0.0
      %540 = vmatmul.mubr.f32.gmra.mxu0 %v342
      %v541 = vpop.f32.mrf.mxu0
      %v542 = vadd.f32 0.0, %v541
      %v543 = vpop.f32.mrf.mxu0
      %544 = vmatprep.mubr.f32.mxu0 0.0
      %545 = vmatmul.mubr.f32.gmra.mxu0 %v345
      %v546 = vpop.f32.mrf.mxu0
      %v547 = vadd.f32 0.0, %v546
      %v548 = vpop.f32.mrf.mxu0
      %549 = vmatprep.mubr.f32.mxu0 0.0
      %550 = vmatmul.mubr.f32.gmra.mxu0 %v348
      %v551 = vpop.f32.mrf.mxu0
      %v552 = vadd.f32 0.0, %v551
      %v553 = vpop.f32.mrf.mxu0
      %554 = vmatprep.mubr.f32.mxu0 0.0
      %555 = vmatmul.mubr.f32.gmra.mxu0 %v351
      %v556 = vpop.f32.mrf.mxu0
      %v557 = vadd.f32 0.0, %v556
      %v558 = vpop.f32.mrf.mxu0
      %559 = vmatprep.mubr.f32.mxu0 0.0
      %560 = vmatmul.mubr.f32.gmra.mxu0 %v354
      %v561 = vpop.f32.mrf.mxu0
      %v562 = vadd.f32 0.0, %v561
      %v563 = vpop.f32.mrf.mxu0
      %564 = vmatprep.mubr.f32.mxu0 0.0
      %565 = vmatmul.mubr.f32.gmra.mxu0 %v357
      %v566 = vpop.f32.mrf.mxu0
      %v567 = vadd.f32 0.0, %v566
      %v568 = vpop.f32.mrf.mxu0
      %569 = vmatprep.mubr.f32.mxu0 0.0
      %570 = vmatmul.mubr.f32.gmra.mxu0 %v360
      %v571 = vpop.f32.mrf.mxu0
      %v572 = vadd.f32 0.0, %v571
      %v573 = vpop.f32.mrf.mxu0
      %574 = vmatprep.mubr.f32.mxu0 0.0
      %575 = vmatmul.mubr.f32.gmra.mxu0 %v363
      %v576 = vpop.f32.mrf.mxu0
      %v577 = vadd.f32 0.0, %v576
      %v578 = vpop.f32.mrf.mxu0
      %579 = vmatprep.mubr.f32.mxu0 0.0
      %580 = vmatmul.mubr.f32.gmra.mxu0 %v366
      %v581 = vpop.f32.mrf.mxu0
      %v582 = vadd.f32 0.0, %v581
      %v583 = vpop.f32.mrf.mxu0
      %584 = vmatprep.mubr.f32.mxu0 0.0
      %585 = vmatmul.mubr.f32.gmra.mxu0 %v369
      %v586 = vpop.f32.mrf.mxu0
      %v587 = vadd.f32 0.0, %v586
      %v588 = vpop.f32.mrf.mxu0
      %589 = vmatprep.mubr.f32.mxu0 0.0
      %590 = vmatmul.mubr.f32.gmra.mxu0 %v372
      %v591 = vpop.f32.mrf.mxu0
      %v592 = vadd.f32 0.0, %v591
      %v593 = vpop.f32.mrf.mxu0
      %594 = vmatprep.mubr.f32.mxu0 0.0
      %595 = vmatmul.mubr.f32.gmra.mxu0 %v375
      %v596 = vpop.f32.mrf.mxu0
      %v597 = vadd.f32 0.0, %v596
      %v598 = vpop.f32.mrf.mxu0
      %599 = vmatprep.mubr.f32.mxu0 0.0
      %600 = vmatmul.mubr.f32.gmra.mxu0 %v378
      %v601 = vpop.f32.mrf.mxu0
      %v602 = vadd.f32 0.0, %v601
      %v603 = vpop.f32.mrf.mxu0
      %604 = vmatprep.mubr.f32.mxu0 0.0
      %605 = vmatmul.mubr.f32.gmra.mxu0 %v381
      %v606 = vpop.f32.mrf.mxu0
      %v607 = vadd.f32 0.0, %v606
      %v608 = vpop.f32.mrf.mxu0
      %609 = vmatprep.mubr.f32.mxu0 0.0
      %610 = vmatmul.mubr.f32.gmra.mxu0 %v384
      %v611 = vpop.f32.mrf.mxu0
      %v612 = vadd.f32 0.0, %v611
      %v613 = vpop.f32.mrf.mxu0
      %614 = vdwg.mxu0
      %v615 = vld [vmem:[%s2] sm:$0x7]
      %v616 = vlaneseq
      %v617 = vshrl.u32 %v616, 7
      %v618 = vsub.s32 0, %v617
      %v619 = vrot.slane %v287, %v618
      %v621 = vsel %vm386, %v615, 0
      %623 = vmatprep.subr.mxu0 0.0
      %624 = vmatpush1.msra.mxu0 0.0
      %625 = vmatprep.subr.mxu0 0.0
      %626 = vmatpush1.msra.mxu0 0.0
      %627 = vmatprep.subr.mxu0 0.0
      %628 = vmatpush1.msra.mxu0 0.0
      %629 = vmatprep.subr.mxu0 0.0
      %630 = vmatpush1.msra.mxu0 0.0
      %631 = vmatprep.subr.mxu0 0.0
      %632 = vmatpush1.msra.mxu0 0.0
      %633 = vmatprep.subr.mxu0 0.0
      %634 = vmatpush1.msra.mxu0 0.0
      %635 = vmatprep.subr.mxu0 0.0
      %636 = vmatpush1.msra.mxu0 0.0
      %637 = vmatprep.subr.mxu0 0.0
      %638 = vmatpush1.msra.mxu0 0.0
      %639 = vmatprep.subr.mxu0 0.0
      %640 = vmatpush1.msra.mxu0 0.0
      %641 = vmatprep.subr.mxu0 0.0
      %642 = vmatpush1.msra.mxu0 0.0
      %643 = vmatprep.subr.mxu0 0.0
      %644 = vmatpush1.msra.mxu0 0.0
      %645 = vmatprep.subr.mxu0 0.0
      %646 = vmatpush1.msra.mxu0 0.0
      %647 = vmatprep.subr.mxu0 0.0
      %648 = vmatpush1.msra.mxu0 0.0
      %649 = vmatprep.subr.mxu0 0.0
      %650 = vmatpush1.msra.mxu0 0.0
      %651 = vmatprep.subr.mxu0 0.0
      %652 = vmatpush1.msra.mxu0 0.0
      %653 = vmatprep.subr.mxu0 0.0
      %654 = vmatpush1.msra.mxu0 %v621
      %655 = vmatprep.subr.mxu0 0.0
      %656 = vmatpush2.msra.mxu0 0.0
      %657 = vmatprep.subr.mxu0 0.0
      %658 = vmatpush2.msra.mxu0 0.0
      %659 = vmatprep.subr.mxu0 0.0
      %660 = vmatpush2.msra.mxu0 0.0
      %661 = vmatprep.subr.mxu0 0.0
      %662 = vmatpush2.msra.mxu0 0.0
      %663 = vmatprep.subr.mxu0 0.0
      %664 = vmatpush2.msra.mxu0 0.0
      %665 = vmatprep.subr.mxu0 0.0
      %666 = vmatpush2.msra.mxu0 0.0
      %667 = vmatprep.subr.mxu0 0.0
      %668 = vmatpush2.msra.mxu0 0.0
      %669 = vmatprep.subr.mxu0 0.0
      %670 = vmatpush2.msra.mxu0 0.0
      %671 = vmatprep.subr.mxu0 0.0
      %672 = vmatpush2.msra.mxu0 0.0
      %673 = vmatprep.subr.mxu0 0.0
      %674 = vmatpush2.msra.mxu0 0.0
      %675 = vmatprep.subr.mxu0 0.0
      %676 = vmatpush2.msra.mxu0 0.0
      %677 = vmatprep.subr.mxu0 0.0
      %678 = vmatpush2.msra.mxu0 0.0
      %679 = vmatprep.subr.mxu0 0.0
      %680 = vmatpush2.msra.mxu0 0.0
      %681 = vmatprep.subr.mxu0 0.0
      %682 = vmatpush2.msra.mxu0 0.0
      %683 = vmatprep.subr.mxu0 0.0
      %684 = vmatpush2.msra.mxu0 0.0
      %685 = vmatprep.subr.mxu0 0.0
      %686 = vmatpush2.msra.mxu0 0.0
      %687 = vmatprep.mubr.f32.mxu0 0.0
      %688 = vmatmul.mubr.f32.gmra.mxu0 %v291
      %v689 = vpop.f32.mrf.mxu0
      %v690 = vadd.f32 %v619, %v689
      %v691 = vpop.f32.mrf.mxu0
      %692 = vmatprep.mubr.f32.mxu0 0.0
      %693 = vmatmul.mubr.f32.gmra.mxu0 %v294
      %v694 = vpop.f32.mrf.mxu0
      %v695 = vadd.f32 %v619, %v694
      %v696 = vpop.f32.mrf.mxu0
      %697 = vmatprep.mubr.f32.mxu0 0.0
      %698 = vmatmul.mubr.f32.gmra.mxu0 %v297
      %v699 = vpop.f32.mrf.mxu0
      %v700 = vadd.f32 %v619, %v699
      %v701 = vpop.f32.mrf.mxu0
      %702 = vmatprep.mubr.f32.mxu0 0.0
      %703 = vmatmul.mubr.f32.gmra.mxu0 %v300
      %v704 = vpop.f32.mrf.mxu0
      %v705 = vadd.f32 %v619, %v704
      %v706 = vpop.f32.mrf.mxu0
      %707 = vmatprep.mubr.f32.mxu0 0.0
      %708 = vmatmul.mubr.f32.gmra.mxu0 %v303
      %v709 = vpop.f32.mrf.mxu0
      %v710 = vadd.f32 %v619, %v709
      %v711 = vpop.f32.mrf.mxu0
      %712 = vmatprep.mubr.f32.mxu0 0.0
      %713 = vmatmul.mubr.f32.gmra.mxu0 %v306
      %v714 = vpop.f32.mrf.mxu0
      %v715 = vadd.f32 %v619, %v714
      %v716 = vpop.f32.mrf.mxu0
      %717 = vmatprep.mubr.f32.mxu0 0.0
      %718 = vmatmul.mubr.f32.gmra.mxu0 %v309
      %v719 = vpop.f32.mrf.mxu0
      %v720 = vadd.f32 %v619, %v719
      %v721 = vpop.f32.mrf.mxu0
      %722 = vmatprep.mubr.f32.mxu0 0.0
      %723 = vmatmul.mubr.f32.gmra.mxu0 %v312
      %v724 = vpop.f32.mrf.mxu0
      %v725 = vadd.f32 %v619, %v724
      %v726 = vpop.f32.mrf.mxu0
      %727 = vmatprep.mubr.f32.mxu0 0.0
      %728 = vmatmul.mubr.f32.gmra.mxu0 %v315
      %v729 = vpop.f32.mrf.mxu0
      %v730 = vadd.f32 %v619, %v729
      %v731 = vpop.f32.mrf.mxu0
      %732 = vmatprep.mubr.f32.mxu0 0.0
      %733 = vmatmul.mubr.f32.gmra.mxu0 %v318
      %v734 = vpop.f32.mrf.mxu0
      %v735 = vadd.f32 %v619, %v734
      %v736 = vpop.f32.mrf.mxu0
      %737 = vmatprep.mubr.f32.mxu0 0.0
      %738 = vmatmul.mubr.f32.gmra.mxu0 %v321
      %v739 = vpop.f32.mrf.mxu0
      %v740 = vadd.f32 %v619, %v739
      %v741 = vpop.f32.mrf.mxu0
      %742 = vmatprep.mubr.f32.mxu0 0.0
      %743 = vmatmul.mubr.f32.gmra.mxu0 %v324
      %v744 = vpop.f32.mrf.mxu0
      %v745 = vadd.f32 %v619, %v744
      %v746 = vpop.f32.mrf.mxu0
      %747 = vmatprep.mubr.f32.mxu0 0.0
      %748 = vmatmul.mubr.f32.gmra.mxu0 %v327
      %v749 = vpop.f32.mrf.mxu0
      %v750 = vadd.f32 %v619, %v749
      %v751 = vpop.f32.mrf.mxu0
      %752 = vmatprep.mubr.f32.mxu0 0.0
      %753 = vmatmul.mubr.f32.gmra.mxu0 %v330
      %v754 = vpop.f32.mrf.mxu0
      %v755 = vadd.f32 %v619, %v754
      %v756 = vpop.f32.mrf.mxu0
      %757 = vmatprep.mubr.f32.mxu0 0.0
      %758 = vmatmul.mubr.f32.gmra.mxu0 %v333
      %v759 = vpop.f32.mrf.mxu0
      %v760 = vadd.f32 %v619, %v759
      %v761 = vpop.f32.mrf.mxu0
      %762 = vmatprep.mubr.f32.mxu0 0.0
      %763 = vmatmul.mubr.f32.gmra.mxu0 %v336
      %v764 = vpop.f32.mrf.mxu0
      %v765 = vadd.f32 %v619, %v764
      %v766 = vpop.f32.mrf.mxu0
      %767 = vmatprep.mubr.f32.mxu0 0.0
      %768 = vmatmul.mubr.f32.gmra.mxu0 %v339
      %v769 = vpop.f32.mrf.mxu0
      %v770 = vadd.f32 %v619, %v769
      %v771 = vpop.f32.mrf.mxu0
      %772 = vmatprep.mubr.f32.mxu0 0.0
      %773 = vmatmul.mubr.f32.gmra.mxu0 %v342
      %v774 = vpop.f32.mrf.mxu0
      %v775 = vadd.f32 %v619, %v774
      %v776 = vpop.f32.mrf.mxu0
      %777 = vmatprep.mubr.f32.mxu0 0.0
      %778 = vmatmul.mubr.f32.gmra.mxu0 %v345
      %v779 = vpop.f32.mrf.mxu0
      %v780 = vadd.f32 %v619, %v779
      %v781 = vpop.f32.mrf.mxu0
      %782 = vmatprep.mubr.f32.mxu0 0.0
      %783 = vmatmul.mubr.f32.gmra.mxu0 %v348
      %v784 = vpop.f32.mrf.mxu0
      %v785 = vadd.f32 %v619, %v784
      %v786 = vpop.f32.mrf.mxu0
      %787 = vmatprep.mubr.f32.mxu0 0.0
      %788 = vmatmul.mubr.f32.gmra.mxu0 %v351
      %v789 = vpop.f32.mrf.mxu0
      %v790 = vadd.f32 %v619, %v789
      %v791 = vpop.f32.mrf.mxu0
      %792 = vmatprep.mubr.f32.mxu0 0.0
      %793 = vmatmul.mubr.f32.gmra.mxu0 %v354
      %v794 = vpop.f32.mrf.mxu0
      %v795 = vadd.f32 %v619, %v794
      %v796 = vpop.f32.mrf.mxu0
      %797 = vmatprep.mubr.f32.mxu0 0.0
      %798 = vmatmul.mubr.f32.gmra.mxu0 %v357
      %v799 = vpop.f32.mrf.mxu0
      %v800 = vadd.f32 %v619, %v799
      %v801 = vpop.f32.mrf.mxu0
      %802 = vmatprep.mubr.f32.mxu0 0.0
      %803 = vmatmul.mubr.f32.gmra.mxu0 %v360
      %v804 = vpop.f32.mrf.mxu0
      %v805 = vadd.f32 %v619, %v804
      %v806 = vpop.f32.mrf.mxu0
      %807 = vmatprep.mubr.f32.mxu0 0.0
      %808 = vmatmul.mubr.f32.gmra.mxu0 %v363
      %v809 = vpop.f32.mrf.mxu0
      %v810 = vadd.f32 %v619, %v809
      %v811 = vpop.f32.mrf.mxu0
      %812 = vmatprep.mubr.f32.mxu0 0.0
      %813 = vmatmul.mubr.f32.gmra.mxu0 %v366
      %v814 = vpop.f32.mrf.mxu0
      %v815 = vadd.f32 %v619, %v814
      %v816 = vpop.f32.mrf.mxu0
      %817 = vmatprep.mubr.f32.mxu0 0.0
      %818 = vmatmul.mubr.f32.gmra.mxu0 %v369
      %v819 = vpop.f32.mrf.mxu0
      %v820 = vadd.f32 %v619, %v819
      %v821 = vpop.f32.mrf.mxu0
      %822 = vmatprep.mubr.f32.mxu0 0.0
      %823 = vmatmul.mubr.f32.gmra.mxu0 %v372
      %v824 = vpop.f32.mrf.mxu0
      %v825 = vadd.f32 %v619, %v824
      %v826 = vpop.f32.mrf.mxu0
      %827 = vmatprep.mubr.f32.mxu0 0.0
      %828 = vmatmul.mubr.f32.gmra.mxu0 %v375
      %v829 = vpop.f32.mrf.mxu0
      %v830 = vadd.f32 %v619, %v829
      %v831 = vpop.f32.mrf.mxu0
      %832 = vmatprep.mubr.f32.mxu0 0.0
      %833 = vmatmul.mubr.f32.gmra.mxu0 %v378
      %v834 = vpop.f32.mrf.mxu0
      %v835 = vadd.f32 %v619, %v834
      %v836 = vpop.f32.mrf.mxu0
      %837 = vmatprep.mubr.f32.mxu0 0.0
      %838 = vmatmul.mubr.f32.gmra.mxu0 %v381
      %v839 = vpop.f32.mrf.mxu0
      %v840 = vadd.f32 %v619, %v839
      %v841 = vpop.f32.mrf.mxu0
      %842 = vmatprep.mubr.f32.mxu0 0.0
      %843 = vmatmul.mubr.f32.gmra.mxu0 %v384
      %v844 = vpop.f32.mrf.mxu0
      %v845 = vadd.f32 %v619, %v844
      %v846 = vpop.f32.mrf.mxu0
      %847 = vdwg.mxu0
      %v848 = vmax.f32 %v690, 0.0
      %v849 = vmax.f32 %v695, 0.0
      %v850 = vmax.f32 %v700, 0.0
      %v851 = vmax.f32 %v705, 0.0
      %v852 = vmax.f32 %v710, 0.0
      %v853 = vmax.f32 %v715, 0.0
      %v854 = vmax.f32 %v720, 0.0
      %v855 = vmax.f32 %v725, 0.0
      %v856 = vmax.f32 %v730, 0.0
      %v857 = vmax.f32 %v735, 0.0
      %v858 = vmax.f32 %v740, 0.0
      %v859 = vmax.f32 %v745, 0.0
      %v860 = vmax.f32 %v750, 0.0
      %v861 = vmax.f32 %v755, 0.0
      %v862 = vmax.f32 %v760, 0.0
      %v863 = vmax.f32 %v765, 0.0
      %v864 = vmax.f32 %v770, 0.0
      %v865 = vmax.f32 %v775, 0.0
      %v866 = vmax.f32 %v780, 0.0
      %v867 = vmax.f32 %v785, 0.0
      %v868 = vmax.f32 %v790, 0.0
      %v869 = vmax.f32 %v795, 0.0
      %v870 = vmax.f32 %v800, 0.0
      %v871 = vmax.f32 %v805, 0.0
      %v872 = vmax.f32 %v810, 0.0
      %v873 = vmax.f32 %v815, 0.0
      %v874 = vmax.f32 %v820, 0.0
      %v875 = vmax.f32 %v825, 0.0
      %v876 = vmax.f32 %v830, 0.0
      %v877 = vmax.f32 %v835, 0.0
      %v878 = vmax.f32 %v840, 0.0
      %v879 = vmax.f32 %v845, 0.0
      %v880 = vld [vmem:[%s3] sm:$0xff]
      %v881 = vld [vmem:[%s3 + $0x8] sm:$0xff]
      %v882 = vld [vmem:[%s3 + $0x10] sm:$0xff]
      %v883 = vld [vmem:[%s3 + $0x18] sm:$0xff]
      %v884 = vld [vmem:[%s3 + $0x20] sm:$0xff]
      %v885 = vld [vmem:[%s3 + $0x28] sm:$0xff]
      %v886 = vld [vmem:[%s3 + $0x30] sm:$0xff]
      %v887 = vld [vmem:[%s3 + $0x38] sm:$0xff]
      %v888 = vld [vmem:[%s3 + $0x40] sm:$0xff]
      %v889 = vld [vmem:[%s3 + $0x48] sm:$0xff]
      %v890 = vld [vmem:[%s3 + $0x50] sm:$0xff]
      %v891 = vld [vmem:[%s3 + $0x58] sm:$0xff]
      %v892 = vlaneseq
      %v893 = vshrl.u32 %v892, 7
      %v894 = vsub.s32 1, %v893
      %v895 = vrot.slane %v287, %v894
      %vm896 = vcmask 785408
      %v898 = vsel %vm896, %v848, 0
      %v901 = vsel %vm896, %v849, 0
      %v904 = vsel %vm896, %v850, 0
      %v907 = vsel %vm896, %v851, 0
      %v910 = vsel %vm896, %v852, 0
      %v913 = vsel %vm896, %v853, 0
      %v916 = vsel %vm896, %v854, 0
      %v919 = vsel %vm896, %v855, 0
      %v922 = vsel %vm896, %v856, 0
      %v925 = vsel %vm896, %v857, 0
      %v928 = vsel %vm896, %v858, 0
      %v931 = vsel %vm896, %v859, 0
      %v934 = vsel %vm896, %v860, 0
      %v937 = vsel %vm896, %v861, 0
      %v940 = vsel %vm896, %v862, 0
      %v943 = vsel %vm896, %v863, 0
      %v946 = vsel %vm896, %v864, 0
      %v949 = vsel %vm896, %v865, 0
      %v952 = vsel %vm896, %v866, 0
      %v955 = vsel %vm896, %v867, 0
      %v958 = vsel %vm896, %v868, 0
      %v961 = vsel %vm896, %v869, 0
      %v964 = vsel %vm896, %v870, 0
      %v967 = vsel %vm896, %v871, 0
      %v970 = vsel %vm896, %v872, 0
      %v973 = vsel %vm896, %v873, 0
      %v976 = vsel %vm896, %v874, 0
      %v979 = vsel %vm896, %v875, 0
      %v982 = vsel %vm896, %v876, 0
      %v985 = vsel %vm896, %v877, 0
      %v988 = vsel %vm896, %v878, 0
      %v991 = vsel %vm896, %v879, 0
      %993 = vmatprep.subr.mxu0 0.0
      %994 = vmatpush1.msra.mxu0 0.0
      %995 = vmatprep.subr.mxu0 0.0
      %996 = vmatpush1.msra.mxu0 0.0
      %997 = vmatprep.subr.mxu0 0.0
      %998 = vmatpush1.msra.mxu0 0.0
      %999 = vmatprep.subr.mxu0 0.0
      %1000 = vmatpush1.msra.mxu0 0.0
      %1001 = vmatprep.subr.mxu0 0.0
      %1002 = vmatpush1.msra.mxu0 %v891
      %1003 = vmatprep.subr.mxu0 0.0
      %1004 = vmatpush1.msra.mxu0 %v890
      %1005 = vmatprep.subr.mxu0 0.0
      %1006 = vmatpush1.msra.mxu0 %v889
      %1007 = vmatprep.subr.mxu0 0.0
      %1008 = vmatpush1.msra.mxu0 %v888
      %1009 = vmatprep.subr.mxu0 0.0
      %1010 = vmatpush1.msra.mxu0 %v887
      %1011 = vmatprep.subr.mxu0 0.0
      %1012 = vmatpush1.msra.mxu0 %v886
      %1013 = vmatprep.subr.mxu0 0.0
      %1014 = vmatpush1.msra.mxu0 %v885
      %1015 = vmatprep.subr.mxu0 0.0
      %1016 = vmatpush1.msra.mxu0 %v884
      %1017 = vmatprep.subr.mxu0 0.0
      %1018 = vmatpush1.msra.mxu0 %v883
      %1019 = vmatprep.subr.mxu0 0.0
      %1020 = vmatpush1.msra.mxu0 %v882
      %1021 = vmatprep.subr.mxu0 0.0
      %1022 = vmatpush1.msra.mxu0 %v881
      %1023 = vmatprep.subr.mxu0 0.0
      %1024 = vmatpush1.msra.mxu0 %v880
      %1025 = vmatprep.subr.mxu0 0.0
      %1026 = vmatpush2.msra.mxu0 0.0
      %1027 = vmatprep.subr.mxu0 0.0
      %1028 = vmatpush2.msra.mxu0 0.0
      %1029 = vmatprep.subr.mxu0 0.0
      %1030 = vmatpush2.msra.mxu0 0.0
      %1031 = vmatprep.subr.mxu0 0.0
      %1032 = vmatpush2.msra.mxu0 0.0
      %1033 = vmatprep.subr.mxu0 0.0
      %1034 = vmatpush2.msra.mxu0 0.0
      %1035 = vmatprep.subr.mxu0 0.0
      %1036 = vmatpush2.msra.mxu0 0.0
      %1037 = vmatprep.subr.mxu0 0.0
      %1038 = vmatpush2.msra.mxu0 0.0
      %1039 = vmatprep.subr.mxu0 0.0
      %1040 = vmatpush2.msra.mxu0 0.0
      %1041 = vmatprep.subr.mxu0 0.0
      %1042 = vmatpush2.msra.mxu0 0.0
      %1043 = vmatprep.subr.mxu0 0.0
      %1044 = vmatpush2.msra.mxu0 0.0
      %1045 = vmatprep.subr.mxu0 0.0
      %1046 = vmatpush2.msra.mxu0 0.0
      %1047 = vmatprep.subr.mxu0 0.0
      %1048 = vmatpush2.msra.mxu0 0.0
      %1049 = vmatprep.subr.mxu0 0.0
      %1050 = vmatpush2.msra.mxu0 0.0
      %1051 = vmatprep.subr.mxu0 0.0
      %1052 = vmatpush2.msra.mxu0 0.0
      %1053 = vmatprep.subr.mxu0 0.0
      %1054 = vmatpush2.msra.mxu0 0.0
      %1055 = vmatprep.subr.mxu0 0.0
      %1056 = vmatpush2.msra.mxu0 0.0
      %1057 = vmatprep.mubr.f32.mxu0 0.0
      %1058 = vmatmul.mubr.f32.gmra.mxu0 %v898
      %v1059 = vpop.f32.mrf.mxu0
      %v1060 = vadd.f32 %v895, %v1059
      %v1061 = vpop.f32.mrf.mxu0
      %1062 = vmatprep.mubr.f32.mxu0 0.0
      %1063 = vmatmul.mubr.f32.gmra.mxu0 %v901
      %v1064 = vpop.f32.mrf.mxu0
      %v1065 = vadd.f32 %v895, %v1064
      %v1066 = vpop.f32.mrf.mxu0
      %1067 = vmatprep.mubr.f32.mxu0 0.0
      %1068 = vmatmul.mubr.f32.gmra.mxu0 %v904
      %v1069 = vpop.f32.mrf.mxu0
      %v1070 = vadd.f32 %v895, %v1069
      %v1071 = vpop.f32.mrf.mxu0
      %1072 = vmatprep.mubr.f32.mxu0 0.0
      %1073 = vmatmul.mubr.f32.gmra.mxu0 %v907
      %v1074 = vpop.f32.mrf.mxu0
      %v1075 = vadd.f32 %v895, %v1074
      %v1076 = vpop.f32.mrf.mxu0
      %1077 = vmatprep.mubr.f32.mxu0 0.0
      %1078 = vmatmul.mubr.f32.gmra.mxu0 %v910
      %v1079 = vpop.f32.mrf.mxu0
      %v1080 = vadd.f32 %v895, %v1079
      %v1081 = vpop.f32.mrf.mxu0
      %1082 = vmatprep.mubr.f32.mxu0 0.0
      %1083 = vmatmul.mubr.f32.gmra.mxu0 %v913
      %v1084 = vpop.f32.mrf.mxu0
      %v1085 = vadd.f32 %v895, %v1084
      %v1086 = vpop.f32.mrf.mxu0
      %1087 = vmatprep.mubr.f32.mxu0 0.0
      %1088 = vmatmul.mubr.f32.gmra.mxu0 %v916
      %v1089 = vpop.f32.mrf.mxu0
      %v1090 = vadd.f32 %v895, %v1089
      %v1091 = vpop.f32.mrf.mxu0
      %1092 = vmatprep.mubr.f32.mxu0 0.0
      %1093 = vmatmul.mubr.f32.gmra.mxu0 %v919
      %v1094 = vpop.f32.mrf.mxu0
      %v1095 = vadd.f32 %v895, %v1094
      %v1096 = vpop.f32.mrf.mxu0
      %1097 = vmatprep.mubr.f32.mxu0 0.0
      %1098 = vmatmul.mubr.f32.gmra.mxu0 %v922
      %v1099 = vpop.f32.mrf.mxu0
      %v1100 = vadd.f32 %v895, %v1099
      %v1101 = vpop.f32.mrf.mxu0
      %1102 = vmatprep.mubr.f32.mxu0 0.0
      %1103 = vmatmul.mubr.f32.gmra.mxu0 %v925
      %v1104 = vpop.f32.mrf.mxu0
      %v1105 = vadd.f32 %v895, %v1104
      %v1106 = vpop.f32.mrf.mxu0
      %1107 = vmatprep.mubr.f32.mxu0 0.0
      %1108 = vmatmul.mubr.f32.gmra.mxu0 %v928
      %v1109 = vpop.f32.mrf.mxu0
      %v1110 = vadd.f32 %v895, %v1109
      %v1111 = vpop.f32.mrf.mxu0
      %1112 = vmatprep.mubr.f32.mxu0 0.0
      %1113 = vmatmul.mubr.f32.gmra.mxu0 %v931
      %v1114 = vpop.f32.mrf.mxu0
      %v1115 = vadd.f32 %v895, %v1114
      %v1116 = vpop.f32.mrf.mxu0
      %1117 = vmatprep.mubr.f32.mxu0 0.0
      %1118 = vmatmul.mubr.f32.gmra.mxu0 %v934
      %v1119 = vpop.f32.mrf.mxu0
      %v1120 = vadd.f32 %v895, %v1119
      %v1121 = vpop.f32.mrf.mxu0
      %1122 = vmatprep.mubr.f32.mxu0 0.0
      %1123 = vmatmul.mubr.f32.gmra.mxu0 %v937
      %v1124 = vpop.f32.mrf.mxu0
      %v1125 = vadd.f32 %v895, %v1124
      %v1126 = vpop.f32.mrf.mxu0
      %1127 = vmatprep.mubr.f32.mxu0 0.0
      %1128 = vmatmul.mubr.f32.gmra.mxu0 %v940
      %v1129 = vpop.f32.mrf.mxu0
      %v1130 = vadd.f32 %v895, %v1129
      %v1131 = vpop.f32.mrf.mxu0
      %1132 = vmatprep.mubr.f32.mxu0 0.0
      %1133 = vmatmul.mubr.f32.gmra.mxu0 %v943
      %v1134 = vpop.f32.mrf.mxu0
      %v1135 = vadd.f32 %v895, %v1134
      %v1136 = vpop.f32.mrf.mxu0
      %1137 = vmatprep.mubr.f32.mxu0 0.0
      %1138 = vmatmul.mubr.f32.gmra.mxu0 %v946
      %v1139 = vpop.f32.mrf.mxu0
      %v1140 = vadd.f32 %v895, %v1139
      %v1141 = vpop.f32.mrf.mxu0
      %1142 = vmatprep.mubr.f32.mxu0 0.0
      %1143 = vmatmul.mubr.f32.gmra.mxu0 %v949
      %v1144 = vpop.f32.mrf.mxu0
      %v1145 = vadd.f32 %v895, %v1144
      %v1146 = vpop.f32.mrf.mxu0
      %1147 = vmatprep.mubr.f32.mxu0 0.0
      %1148 = vmatmul.mubr.f32.gmra.mxu0 %v952
      %v1149 = vpop.f32.mrf.mxu0
      %v1150 = vadd.f32 %v895, %v1149
      %v1151 = vpop.f32.mrf.mxu0
      %1152 = vmatprep.mubr.f32.mxu0 0.0
      %1153 = vmatmul.mubr.f32.gmra.mxu0 %v955
      %v1154 = vpop.f32.mrf.mxu0
      %v1155 = vadd.f32 %v895, %v1154
      %v1156 = vpop.f32.mrf.mxu0
      %1157 = vmatprep.mubr.f32.mxu0 0.0
      %1158 = vmatmul.mubr.f32.gmra.mxu0 %v958
      %v1159 = vpop.f32.mrf.mxu0
      %v1160 = vadd.f32 %v895, %v1159
      %v1161 = vpop.f32.mrf.mxu0
      %1162 = vmatprep.mubr.f32.mxu0 0.0
      %1163 = vmatmul.mubr.f32.gmra.mxu0 %v961
      %v1164 = vpop.f32.mrf.mxu0
      %v1165 = vadd.f32 %v895, %v1164
      %v1166 = vpop.f32.mrf.mxu0
      %1167 = vmatprep.mubr.f32.mxu0 0.0
      %1168 = vmatmul.mubr.f32.gmra.mxu0 %v964
      %v1169 = vpop.f32.mrf.mxu0
      %v1170 = vadd.f32 %v895, %v1169
      %v1171 = vpop.f32.mrf.mxu0
      %1172 = vmatprep.mubr.f32.mxu0 0.0
      %1173 = vmatmul.mubr.f32.gmra.mxu0 %v967
      %v1174 = vpop.f32.mrf.mxu0
      %v1175 = vadd.f32 %v895, %v1174
      %v1176 = vpop.f32.mrf.mxu0
      %1177 = vmatprep.mubr.f32.mxu0 0.0
      %1178 = vmatmul.mubr.f32.gmra.mxu0 %v970
      %v1179 = vpop.f32.mrf.mxu0
      %v1180 = vadd.f32 %v895, %v1179
      %v1181 = vpop.f32.mrf.mxu0
      %1182 = vmatprep.mubr.f32.mxu0 0.0
      %1183 = vmatmul.mubr.f32.gmra.mxu0 %v973
      %v1184 = vpop.f32.mrf.mxu0
      %v1185 = vadd.f32 %v895, %v1184
      %v1186 = vpop.f32.mrf.mxu0
      %1187 = vmatprep.mubr.f32.mxu0 0.0
      %1188 = vmatmul.mubr.f32.gmra.mxu0 %v976
      %v1189 = vpop.f32.mrf.mxu0
      %v1190 = vadd.f32 %v895, %v1189
      %v1191 = vpop.f32.mrf.mxu0
      %1192 = vmatprep.mubr.f32.mxu0 0.0
      %1193 = vmatmul.mubr.f32.gmra.mxu0 %v979
      %v1194 = vpop.f32.mrf.mxu0
      %v1195 = vadd.f32 %v895, %v1194
      %v1196 = vpop.f32.mrf.mxu0
      %1197 = vmatprep.mubr.f32.mxu0 0.0
      %1198 = vmatmul.mubr.f32.gmra.mxu0 %v982
      %v1199 = vpop.f32.mrf.mxu0
      %v1200 = vadd.f32 %v895, %v1199
      %v1201 = vpop.f32.mrf.mxu0
      %1202 = vmatprep.mubr.f32.mxu0 0.0
      %1203 = vmatmul.mubr.f32.gmra.mxu0 %v985
      %v1204 = vpop.f32.mrf.mxu0
      %v1205 = vadd.f32 %v895, %v1204
      %v1206 = vpop.f32.mrf.mxu0
      %1207 = vmatprep.mubr.f32.mxu0 0.0
      %1208 = vmatmul.mubr.f32.gmra.mxu0 %v988
      %v1209 = vpop.f32.mrf.mxu0
      %v1210 = vadd.f32 %v895, %v1209
      %v1211 = vpop.f32.mrf.mxu0
      %1212 = vmatprep.mubr.f32.mxu0 0.0
      %1213 = vmatmul.mubr.f32.gmra.mxu0 %v991
      %v1214 = vpop.f32.mrf.mxu0
      %v1215 = vadd.f32 %v895, %v1214
      %v1216 = vpop.f32.mrf.mxu0
      %1217 = vdwg.mxu0
      %v1218 = vmax.f32 %v1060, 0.0
      %v1219 = vmax.f32 %v1065, 0.0
      %v1220 = vmax.f32 %v1070, 0.0
      %v1221 = vmax.f32 %v1075, 0.0
      %v1222 = vmax.f32 %v1080, 0.0
      %v1223 = vmax.f32 %v1085, 0.0
      %v1224 = vmax.f32 %v1090, 0.0
      %v1225 = vmax.f32 %v1095, 0.0
      %v1226 = vmax.f32 %v1100, 0.0
      %v1227 = vmax.f32 %v1105, 0.0
      %v1228 = vmax.f32 %v1110, 0.0
      %v1229 = vmax.f32 %v1115, 0.0
      %v1230 = vmax.f32 %v1120, 0.0
      %v1231 = vmax.f32 %v1125, 0.0
      %v1232 = vmax.f32 %v1130, 0.0
      %v1233 = vmax.f32 %v1135, 0.0
      %v1234 = vmax.f32 %v1140, 0.0
      %v1235 = vmax.f32 %v1145, 0.0
      %v1236 = vmax.f32 %v1150, 0.0
      %v1237 = vmax.f32 %v1155, 0.0
      %v1238 = vmax.f32 %v1160, 0.0
      %v1239 = vmax.f32 %v1165, 0.0
      %v1240 = vmax.f32 %v1170, 0.0
      %v1241 = vmax.f32 %v1175, 0.0
      %v1242 = vmax.f32 %v1180, 0.0
      %v1243 = vmax.f32 %v1185, 0.0
      %v1244 = vmax.f32 %v1190, 0.0
      %v1245 = vmax.f32 %v1195, 0.0
      %v1246 = vmax.f32 %v1200, 0.0
      %v1247 = vmax.f32 %v1205, 0.0
      %v1248 = vmax.f32 %v1210, 0.0
      %v1249 = vmax.f32 %v1215, 0.0
      %v1250 = vadd.f32 %v1218, %v457
      %v1251 = vadd.f32 %v1219, %v462
      %v1252 = vadd.f32 %v1220, %v467
      %v1253 = vadd.f32 %v1221, %v472
      %v1254 = vadd.f32 %v1222, %v477
      %v1255 = vadd.f32 %v1223, %v482
      %v1256 = vadd.f32 %v1224, %v487
      %v1257 = vadd.f32 %v1225, %v492
      %v1258 = vadd.f32 %v1226, %v497
      %v1259 = vadd.f32 %v1227, %v502
      %v1260 = vadd.f32 %v1228, %v507
      %v1261 = vadd.f32 %v1229, %v512
      %v1262 = vadd.f32 %v1230, %v517
      %v1263 = vadd.f32 %v1231, %v522
      %v1264 = vadd.f32 %v1232, %v527
      %v1265 = vadd.f32 %v1233, %v532
      %v1266 = vadd.f32 %v1234, %v537
      %v1267 = vadd.f32 %v1235, %v542
      %v1268 = vadd.f32 %v1236, %v547
      %v1269 = vadd.f32 %v1237, %v552
      %v1270 = vadd.f32 %v1238, %v557
      %v1271 = vadd.f32 %v1239, %v562
      %v1272 = vadd.f32 %v1240, %v567
      %v1273 = vadd.f32 %v1241, %v572
      %v1274 = vadd.f32 %v1242, %v577
      %v1275 = vadd.f32 %v1243, %v582
      %v1276 = vadd.f32 %v1244, %v587
      %v1277 = vadd.f32 %v1245, %v592
      %v1278 = vadd.f32 %v1246, %v597
      %v1279 = vadd.f32 %v1247, %v602
      %v1280 = vadd.f32 %v1248, %v607
      %v1281 = vadd.f32 %v1249, %v612
      %s1282 = scalar_lea.vmem %s3, 96
      %v1283 = vld [vmem:[%s1282] sm:$0xff]
      %v1284 = vld [vmem:[%s1282 + $0x8] sm:$0xff]
      %v1285 = vld [vmem:[%s1282 + $0x10] sm:$0xff]
      %v1286 = vld [vmem:[%s1282 + $0x18] sm:$0xff]
      %v1287 = vld [vmem:[%s1282 + $0x20] sm:$0xff]
      %v1288 = vld [vmem:[%s1282 + $0x28] sm:$0xff]
      %v1289 = vld [vmem:[%s1282 + $0x30] sm:$0xff]
      %v1290 = vld [vmem:[%s1282 + $0x38] sm:$0xff]
      %v1291 = vld [vmem:[%s1282 + $0x40] sm:$0xff]
      %v1292 = vld [vmem:[%s1282 + $0x48] sm:$0xff]
      %v1293 = vld [vmem:[%s1282 + $0x50] sm:$0xff]
      %v1294 = vld [vmem:[%s1282 + $0x58] sm:$0xff]
      %v1295 = vlaneseq
      %v1296 = vshrl.u32 %v1295, 7
      %v1297 = vsub.s32 2, %v1296
      %v1298 = vrot.slane %v287, %v1297
      %v1300 = vsel %vm896, %v1250, 0
      %v1303 = vsel %vm896, %v1251, 0
      %v1306 = vsel %vm896, %v1252, 0
      %v1309 = vsel %vm896, %v1253, 0
      %v1312 = vsel %vm896, %v1254, 0
      %v1315 = vsel %vm896, %v1255, 0
      %v1318 = vsel %vm896, %v1256, 0
      %v1321 = vsel %vm896, %v1257, 0
      %v1324 = vsel %vm896, %v1258, 0
      %v1327 = vsel %vm896, %v1259, 0
      %v1330 = vsel %vm896, %v1260, 0
      %v1333 = vsel %vm896, %v1261, 0
      %v1336 = vsel %vm896, %v1262, 0
      %v1339 = vsel %vm896, %v1263, 0
      %v1342 = vsel %vm896, %v1264, 0
      %v1345 = vsel %vm896, %v1265, 0
      %v1348 = vsel %vm896, %v1266, 0
      %v1351 = vsel %vm896, %v1267, 0
      %v1354 = vsel %vm896, %v1268, 0
      %v1357 = vsel %vm896, %v1269, 0
      %v1360 = vsel %vm896, %v1270, 0
      %v1363 = vsel %vm896, %v1271, 0
      %v1366 = vsel %vm896, %v1272, 0
      %v1369 = vsel %vm896, %v1273, 0
      %v1372 = vsel %vm896, %v1274, 0
      %v1375 = vsel %vm896, %v1275, 0
      %v1378 = vsel %vm896, %v1276, 0
      %v1381 = vsel %vm896, %v1277, 0
      %v1384 = vsel %vm896, %v1278, 0
      %v1387 = vsel %vm896, %v1279, 0
      %v1390 = vsel %vm896, %v1280, 0
      %v1393 = vsel %vm896, %v1281, 0
      %1395 = vmatprep.subr.mxu0 0.0
      %1396 = vmatpush1.msra.mxu0 0.0
      %1397 = vmatprep.subr.mxu0 0.0
      %1398 = vmatpush1.msra.mxu0 0.0
      %1399 = vmatprep.subr.mxu0 0.0
      %1400 = vmatpush1.msra.mxu0 0.0
      %1401 = vmatprep.subr.mxu0 0.0
      %1402 = vmatpush1.msra.mxu0 0.0
      %1403 = vmatprep.subr.mxu0 0.0
      %1404 = vmatpush1.msra.mxu0 %v1294
      %1405 = vmatprep.subr.mxu0 0.0
      %1406 = vmatpush1.msra.mxu0 %v1293
      %1407 = vmatprep.subr.mxu0 0.0
      %1408 = vmatpush1.msra.mxu0 %v1292
      %1409 = vmatprep.subr.mxu0 0.0
      %1410 = vmatpush1.msra.mxu0 %v1291
      %1411 = vmatprep.subr.mxu0 0.0
      %1412 = vmatpush1.msra.mxu0 %v1290
      %1413 = vmatprep.subr.mxu0 0.0
      %1414 = vmatpush1.msra.mxu0 %v1289
      %1415 = vmatprep.subr.mxu0 0.0
      %1416 = vmatpush1.msra.mxu0 %v1288
      %1417 = vmatprep.subr.mxu0 0.0
      %1418 = vmatpush1.msra.mxu0 %v1287
      %1419 = vmatprep.subr.mxu0 0.0
      %1420 = vmatpush1.msra.mxu0 %v1286
      %1421 = vmatprep.subr.mxu0 0.0
      %1422 = vmatpush1.msra.mxu0 %v1285
      %1423 = vmatprep.subr.mxu0 0.0
      %1424 = vmatpush1.msra.mxu0 %v1284
      %1425 = vmatprep.subr.mxu0 0.0
      %1426 = vmatpush1.msra.mxu0 %v1283
      %1427 = vmatprep.subr.mxu0 0.0
      %1428 = vmatpush2.msra.mxu0 0.0
      %1429 = vmatprep.subr.mxu0 0.0
      %1430 = vmatpush2.msra.mxu0 0.0
      %1431 = vmatprep.subr.mxu0 0.0
      %1432 = vmatpush2.msra.mxu0 0.0
      %1433 = vmatprep.subr.mxu0 0.0
      %1434 = vmatpush2.msra.mxu0 0.0
      %1435 = vmatprep.subr.mxu0 0.0
      %1436 = vmatpush2.msra.mxu0 0.0
      %1437 = vmatprep.subr.mxu0 0.0
      %1438 = vmatpush2.msra.mxu0 0.0
      %1439 = vmatprep.subr.mxu0 0.0
      %1440 = vmatpush2.msra.mxu0 0.0
      %1441 = vmatprep.subr.mxu0 0.0
      %1442 = vmatpush2.msra.mxu0 0.0
      %1443 = vmatprep.subr.mxu0 0.0
      %1444 = vmatpush2.msra.mxu0 0.0
      %1445 = vmatprep.subr.mxu0 0.0
      %1446 = vmatpush2.msra.mxu0 0.0
      %1447 = vmatprep.subr.mxu0 0.0
      %1448 = vmatpush2.msra.mxu0 0.0
      %1449 = vmatprep.subr.mxu0 0.0
      %1450 = vmatpush2.msra.mxu0 0.0
      %1451 = vmatprep.subr.mxu0 0.0
      %1452 = vmatpush2.msra.mxu0 0.0
      %1453 = vmatprep.subr.mxu0 0.0
      %1454 = vmatpush2.msra.mxu0 0.0
      %1455 = vmatprep.subr.mxu0 0.0
      %1456 = vmatpush2.msra.mxu0 0.0
      %1457 = vmatprep.subr.mxu0 0.0
      %1458 = vmatpush2.msra.mxu0 0.0
      %1459 = vmatprep.mubr.f32.mxu0 0.0
      %1460 = vmatmul.mubr.f32.gmra.mxu0 %v1300
      %v1461 = vpop.f32.mrf.mxu0
      %v1462 = vadd.f32 %v1298, %v1461
      %v1463 = vpop.f32.mrf.mxu0
      %1464 = vmatprep.mubr.f32.mxu0 0.0
      %1465 = vmatmul.mubr.f32.gmra.mxu0 %v1303
      %v1466 = vpop.f32.mrf.mxu0
      %v1467 = vadd.f32 %v1298, %v1466
      %v1468 = vpop.f32.mrf.mxu0
      %1469 = vmatprep.mubr.f32.mxu0 0.0
      %1470 = vmatmul.mubr.f32.gmra.mxu0 %v1306
      %v1471 = vpop.f32.mrf.mxu0
      %v1472 = vadd.f32 %v1298, %v1471
      %v1473 = vpop.f32.mrf.mxu0
      %1474 = vmatprep.mubr.f32.mxu0 0.0
      %1475 = vmatmul.mubr.f32.gmra.mxu0 %v1309
      %v1476 = vpop.f32.mrf.mxu0
      %v1477 = vadd.f32 %v1298, %v1476
      %v1478 = vpop.f32.mrf.mxu0
      %1479 = vmatprep.mubr.f32.mxu0 0.0
      %1480 = vmatmul.mubr.f32.gmra.mxu0 %v1312
      %v1481 = vpop.f32.mrf.mxu0
      %v1482 = vadd.f32 %v1298, %v1481
      %v1483 = vpop.f32.mrf.mxu0
      %1484 = vmatprep.mubr.f32.mxu0 0.0
      %1485 = vmatmul.mubr.f32.gmra.mxu0 %v1315
      %v1486 = vpop.f32.mrf.mxu0
      %v1487 = vadd.f32 %v1298, %v1486
      %v1488 = vpop.f32.mrf.mxu0
      %1489 = vmatprep.mubr.f32.mxu0 0.0
      %1490 = vmatmul.mubr.f32.gmra.mxu0 %v1318
      %v1491 = vpop.f32.mrf.mxu0
      %v1492 = vadd.f32 %v1298, %v1491
      %v1493 = vpop.f32.mrf.mxu0
      %1494 = vmatprep.mubr.f32.mxu0 0.0
      %1495 = vmatmul.mubr.f32.gmra.mxu0 %v1321
      %v1496 = vpop.f32.mrf.mxu0
      %v1497 = vadd.f32 %v1298, %v1496
      %v1498 = vpop.f32.mrf.mxu0
      %1499 = vmatprep.mubr.f32.mxu0 0.0
      %1500 = vmatmul.mubr.f32.gmra.mxu0 %v1324
      %v1501 = vpop.f32.mrf.mxu0
      %v1502 = vadd.f32 %v1298, %v1501
      %v1503 = vpop.f32.mrf.mxu0
      %1504 = vmatprep.mubr.f32.mxu0 0.0
      %1505 = vmatmul.mubr.f32.gmra.mxu0 %v1327
      %v1506 = vpop.f32.mrf.mxu0
      %v1507 = vadd.f32 %v1298, %v1506
      %v1508 = vpop.f32.mrf.mxu0
      %1509 = vmatprep.mubr.f32.mxu0 0.0
      %1510 = vmatmul.mubr.f32.gmra.mxu0 %v1330
      %v1511 = vpop.f32.mrf.mxu0
      %v1512 = vadd.f32 %v1298, %v1511
      %v1513 = vpop.f32.mrf.mxu0
      %1514 = vmatprep.mubr.f32.mxu0 0.0
      %1515 = vmatmul.mubr.f32.gmra.mxu0 %v1333
      %v1516 = vpop.f32.mrf.mxu0
      %v1517 = vadd.f32 %v1298, %v1516
      %v1518 = vpop.f32.mrf.mxu0
      %1519 = vmatprep.mubr.f32.mxu0 0.0
      %1520 = vmatmul.mubr.f32.gmra.mxu0 %v1336
      %v1521 = vpop.f32.mrf.mxu0
      %v1522 = vadd.f32 %v1298, %v1521
      %v1523 = vpop.f32.mrf.mxu0
      %1524 = vmatprep.mubr.f32.mxu0 0.0
      %1525 = vmatmul.mubr.f32.gmra.mxu0 %v1339
      %v1526 = vpop.f32.mrf.mxu0
      %v1527 = vadd.f32 %v1298, %v1526
      %v1528 = vpop.f32.mrf.mxu0
      %1529 = vmatprep.mubr.f32.mxu0 0.0
      %1530 = vmatmul.mubr.f32.gmra.mxu0 %v1342
      %v1531 = vpop.f32.mrf.mxu0
      %v1532 = vadd.f32 %v1298, %v1531
      %v1533 = vpop.f32.mrf.mxu0
      %1534 = vmatprep.mubr.f32.mxu0 0.0
      %1535 = vmatmul.mubr.f32.gmra.mxu0 %v1345
      %v1536 = vpop.f32.mrf.mxu0
      %v1537 = vadd.f32 %v1298, %v1536
      %v1538 = vpop.f32.mrf.mxu0
      %1539 = vmatprep.mubr.f32.mxu0 0.0
      %1540 = vmatmul.mubr.f32.gmra.mxu0 %v1348
      %v1541 = vpop.f32.mrf.mxu0
      %v1542 = vadd.f32 %v1298, %v1541
      %v1543 = vpop.f32.mrf.mxu0
      %1544 = vmatprep.mubr.f32.mxu0 0.0
      %1545 = vmatmul.mubr.f32.gmra.mxu0 %v1351
      %v1546 = vpop.f32.mrf.mxu0
      %v1547 = vadd.f32 %v1298, %v1546
      %v1548 = vpop.f32.mrf.mxu0
      %1549 = vmatprep.mubr.f32.mxu0 0.0
      %1550 = vmatmul.mubr.f32.gmra.mxu0 %v1354
      %v1551 = vpop.f32.mrf.mxu0
      %v1552 = vadd.f32 %v1298, %v1551
      %v1553 = vpop.f32.mrf.mxu0
      %1554 = vmatprep.mubr.f32.mxu0 0.0
      %1555 = vmatmul.mubr.f32.gmra.mxu0 %v1357
      %v1556 = vpop.f32.mrf.mxu0
      %v1557 = vadd.f32 %v1298, %v1556
      %v1558 = vpop.f32.mrf.mxu0
      %1559 = vmatprep.mubr.f32.mxu0 0.0
      %1560 = vmatmul.mubr.f32.gmra.mxu0 %v1360
      %v1561 = vpop.f32.mrf.mxu0
      %v1562 = vadd.f32 %v1298, %v1561
      %v1563 = vpop.f32.mrf.mxu0
      %1564 = vmatprep.mubr.f32.mxu0 0.0
      %1565 = vmatmul.mubr.f32.gmra.mxu0 %v1363
      %v1566 = vpop.f32.mrf.mxu0
      %v1567 = vadd.f32 %v1298, %v1566
      %v1568 = vpop.f32.mrf.mxu0
      %1569 = vmatprep.mubr.f32.mxu0 0.0
      %1570 = vmatmul.mubr.f32.gmra.mxu0 %v1366
      %v1571 = vpop.f32.mrf.mxu0
      %v1572 = vadd.f32 %v1298, %v1571
      %v1573 = vpop.f32.mrf.mxu0
      %1574 = vmatprep.mubr.f32.mxu0 0.0
      %1575 = vmatmul.mubr.f32.gmra.mxu0 %v1369
      %v1576 = vpop.f32.mrf.mxu0
      %v1577 = vadd.f32 %v1298, %v1576
      %v1578 = vpop.f32.mrf.mxu0
      %1579 = vmatprep.mubr.f32.mxu0 0.0
      %1580 = vmatmul.mubr.f32.gmra.mxu0 %v1372
      %v1581 = vpop.f32.mrf.mxu0
      %v1582 = vadd.f32 %v1298, %v1581
      %v1583 = vpop.f32.mrf.mxu0
      %1584 = vmatprep.mubr.f32.mxu0 0.0
      %1585 = vmatmul.mubr.f32.gmra.mxu0 %v1375
      %v1586 = vpop.f32.mrf.mxu0
      %v1587 = vadd.f32 %v1298, %v1586
      %v1588 = vpop.f32.mrf.mxu0
      %1589 = vmatprep.mubr.f32.mxu0 0.0
      %1590 = vmatmul.mubr.f32.gmra.mxu0 %v1378
      %v1591 = vpop.f32.mrf.mxu0
      %v1592 = vadd.f32 %v1298, %v1591
      %v1593 = vpop.f32.mrf.mxu0
      %1594 = vmatprep.mubr.f32.mxu0 0.0
      %1595 = vmatmul.mubr.f32.gmra.mxu0 %v1381
      %v1596 = vpop.f32.mrf.mxu0
      %v1597 = vadd.f32 %v1298, %v1596
      %v1598 = vpop.f32.mrf.mxu0
      %1599 = vmatprep.mubr.f32.mxu0 0.0
      %1600 = vmatmul.mubr.f32.gmra.mxu0 %v1384
      %v1601 = vpop.f32.mrf.mxu0
      %v1602 = vadd.f32 %v1298, %v1601
      %v1603 = vpop.f32.mrf.mxu0
      %1604 = vmatprep.mubr.f32.mxu0 0.0
      %1605 = vmatmul.mubr.f32.gmra.mxu0 %v1387
      %v1606 = vpop.f32.mrf.mxu0
      %v1607 = vadd.f32 %v1298, %v1606
      %v1608 = vpop.f32.mrf.mxu0
      %1609 = vmatprep.mubr.f32.mxu0 0.0
      %1610 = vmatmul.mubr.f32.gmra.mxu0 %v1390
      %v1611 = vpop.f32.mrf.mxu0
      %v1612 = vadd.f32 %v1298, %v1611
      %v1613 = vpop.f32.mrf.mxu0
      %1614 = vmatprep.mubr.f32.mxu0 0.0
      %1615 = vmatmul.mubr.f32.gmra.mxu0 %v1393
      %v1616 = vpop.f32.mrf.mxu0
      %v1617 = vadd.f32 %v1298, %v1616
      %v1618 = vpop.f32.mrf.mxu0
      %1619 = vdwg.mxu0
      %v1620 = vmax.f32 %v1462, 0.0
      %v1621 = vmax.f32 %v1467, 0.0
      %v1622 = vmax.f32 %v1472, 0.0
      %v1623 = vmax.f32 %v1477, 0.0
      %v1624 = vmax.f32 %v1482, 0.0
      %v1625 = vmax.f32 %v1487, 0.0
      %v1626 = vmax.f32 %v1492, 0.0
      %v1627 = vmax.f32 %v1497, 0.0
      %v1628 = vmax.f32 %v1502, 0.0
      %v1629 = vmax.f32 %v1507, 0.0
      %v1630 = vmax.f32 %v1512, 0.0
      %v1631 = vmax.f32 %v1517, 0.0
      %v1632 = vmax.f32 %v1522, 0.0
      %v1633 = vmax.f32 %v1527, 0.0
      %v1634 = vmax.f32 %v1532, 0.0
      %v1635 = vmax.f32 %v1537, 0.0
      %v1636 = vmax.f32 %v1542, 0.0
      %v1637 = vmax.f32 %v1547, 0.0
      %v1638 = vmax.f32 %v1552, 0.0
      %v1639 = vmax.f32 %v1557, 0.0
      %v1640 = vmax.f32 %v1562, 0.0
      %v1641 = vmax.f32 %v1567, 0.0
      %v1642 = vmax.f32 %v1572, 0.0
      %v1643 = vmax.f32 %v1577, 0.0
      %v1644 = vmax.f32 %v1582, 0.0
      %v1645 = vmax.f32 %v1587, 0.0
      %v1646 = vmax.f32 %v1592, 0.0
      %v1647 = vmax.f32 %v1597, 0.0
      %v1648 = vmax.f32 %v1602, 0.0
      %v1649 = vmax.f32 %v1607, 0.0
      %v1650 = vmax.f32 %v1612, 0.0
      %v1651 = vmax.f32 %v1617, 0.0
      %s1652 = scalar_lea.vmem %s3, 192
      %v1653 = vld [vmem:[%s1652] sm:$0xff]
      %v1654 = vld [vmem:[%s1652 + $0x8] sm:$0xff]
      %v1655 = vld [vmem:[%s1652 + $0x10] sm:$0xff]
      %v1656 = vld [vmem:[%s1652 + $0x18] sm:$0xff]
      %v1657 = vld [vmem:[%s1652 + $0x20] sm:$0xff]
      %v1658 = vld [vmem:[%s1652 + $0x28] sm:$0xff]
      %v1659 = vld [vmem:[%s1652 + $0x30] sm:$0xff]
      %v1660 = vld [vmem:[%s1652 + $0x38] sm:$0xff]
      %v1661 = vld [vmem:[%s1652 + $0x40] sm:$0xff]
      %v1662 = vld [vmem:[%s1652 + $0x48] sm:$0xff]
      %v1663 = vld [vmem:[%s1652 + $0x50] sm:$0xff]
      %v1664 = vld [vmem:[%s1652 + $0x58] sm:$0xff]
      %v1665 = vlaneseq
      %v1666 = vshrl.u32 %v1665, 7
      %v1667 = vsub.s32 3, %v1666
      %v1668 = vrot.slane %v287, %v1667
      %v1670 = vsel %vm896, %v1620, 0
      %v1673 = vsel %vm896, %v1621, 0
      %v1676 = vsel %vm896, %v1622, 0
      %v1679 = vsel %vm896, %v1623, 0
      %v1682 = vsel %vm896, %v1624, 0
      %v1685 = vsel %vm896, %v1625, 0
      %v1688 = vsel %vm896, %v1626, 0
      %v1691 = vsel %vm896, %v1627, 0
      %v1694 = vsel %vm896, %v1628, 0
      %v1697 = vsel %vm896, %v1629, 0
      %v1700 = vsel %vm896, %v1630, 0
      %v1703 = vsel %vm896, %v1631, 0
      %v1706 = vsel %vm896, %v1632, 0
      %v1709 = vsel %vm896, %v1633, 0
      %v1712 = vsel %vm896, %v1634, 0
      %v1715 = vsel %vm896, %v1635, 0
      %v1718 = vsel %vm896, %v1636, 0
      %v1721 = vsel %vm896, %v1637, 0
      %v1724 = vsel %vm896, %v1638, 0
      %v1727 = vsel %vm896, %v1639, 0
      %v1730 = vsel %vm896, %v1640, 0
      %v1733 = vsel %vm896, %v1641, 0
      %v1736 = vsel %vm896, %v1642, 0
      %v1739 = vsel %vm896, %v1643, 0
      %v1742 = vsel %vm896, %v1644, 0
      %v1745 = vsel %vm896, %v1645, 0
      %v1748 = vsel %vm896, %v1646, 0
      %v1751 = vsel %vm896, %v1647, 0
      %v1754 = vsel %vm896, %v1648, 0
      %v1757 = vsel %vm896, %v1649, 0
      %v1760 = vsel %vm896, %v1650, 0
      %v1763 = vsel %vm896, %v1651, 0
      %1765 = vmatprep.subr.mxu0 0.0
      %1766 = vmatpush1.msra.mxu0 0.0
      %1767 = vmatprep.subr.mxu0 0.0
      %1768 = vmatpush1.msra.mxu0 0.0
      %1769 = vmatprep.subr.mxu0 0.0
      %1770 = vmatpush1.msra.mxu0 0.0
      %1771 = vmatprep.subr.mxu0 0.0
      %1772 = vmatpush1.msra.mxu0 0.0
      %1773 = vmatprep.subr.mxu0 0.0
      %1774 = vmatpush1.msra.mxu0 %v1664
      %1775 = vmatprep.subr.mxu0 0.0
      %1776 = vmatpush1.msra.mxu0 %v1663
      %1777 = vmatprep.subr.mxu0 0.0
      %1778 = vmatpush1.msra.mxu0 %v1662
      %1779 = vmatprep.subr.mxu0 0.0
      %1780 = vmatpush1.msra.mxu0 %v1661
      %1781 = vmatprep.subr.mxu0 0.0
      %1782 = vmatpush1.msra.mxu0 %v1660
      %1783 = vmatprep.subr.mxu0 0.0
      %1784 = vmatpush1.msra.mxu0 %v1659
      %1785 = vmatprep.subr.mxu0 0.0
      %1786 = vmatpush1.msra.mxu0 %v1658
      %1787 = vmatprep.subr.mxu0 0.0
      %1788 = vmatpush1.msra.mxu0 %v1657
      %1789 = vmatprep.subr.mxu0 0.0
      %1790 = vmatpush1.msra.mxu0 %v1656
      %1791 = vmatprep.subr.mxu0 0.0
      %1792 = vmatpush1.msra.mxu0 %v1655
      %1793 = vmatprep.subr.mxu0 0.0
      %1794 = vmatpush1.msra.mxu0 %v1654
      %1795 = vmatprep.subr.mxu0 0.0
      %1796 = vmatpush1.msra.mxu0 %v1653
      %1797 = vmatprep.subr.mxu0 0.0
      %1798 = vmatpush2.msra.mxu0 0.0
      %1799 = vmatprep.subr.mxu0 0.0
      %1800 = vmatpush2.msra.mxu0 0.0
      %1801 = vmatprep.subr.mxu0 0.0
      %1802 = vmatpush2.msra.mxu0 0.0
      %1803 = vmatprep.subr.mxu0 0.0
      %1804 = vmatpush2.msra.mxu0 0.0
      %1805 = vmatprep.subr.mxu0 0.0
      %1806 = vmatpush2.msra.mxu0 0.0
      %1807 = vmatprep.subr.mxu0 0.0
      %1808 = vmatpush2.msra.mxu0 0.0
      %1809 = vmatprep.subr.mxu0 0.0
      %1810 = vmatpush2.msra.mxu0 0.0
      %1811 = vmatprep.subr.mxu0 0.0
      %1812 = vmatpush2.msra.mxu0 0.0
      %1813 = vmatprep.subr.mxu0 0.0
      %1814 = vmatpush2.msra.mxu0 0.0
      %1815 = vmatprep.subr.mxu0 0.0
      %1816 = vmatpush2.msra.mxu0 0.0
      %1817 = vmatprep.subr.mxu0 0.0
      %1818 = vmatpush2.msra.mxu0 0.0
      %1819 = vmatprep.subr.mxu0 0.0
      %1820 = vmatpush2.msra.mxu0 0.0
      %1821 = vmatprep.subr.mxu0 0.0
      %1822 = vmatpush2.msra.mxu0 0.0
      %1823 = vmatprep.subr.mxu0 0.0
      %1824 = vmatpush2.msra.mxu0 0.0
      %1825 = vmatprep.subr.mxu0 0.0
      %1826 = vmatpush2.msra.mxu0 0.0
      %1827 = vmatprep.subr.mxu0 0.0
      %1828 = vmatpush2.msra.mxu0 0.0
      %1829 = vmatprep.mubr.f32.mxu0 0.0
      %1830 = vmatmul.mubr.f32.gmra.mxu0 %v1670
      %v1831 = vpop.f32.mrf.mxu0
      %v1832 = vadd.f32 %v1668, %v1831
      %v1833 = vpop.f32.mrf.mxu0
      %1834 = vmatprep.mubr.f32.mxu0 0.0
      %1835 = vmatmul.mubr.f32.gmra.mxu0 %v1673
      %v1836 = vpop.f32.mrf.mxu0
      %v1837 = vadd.f32 %v1668, %v1836
      %v1838 = vpop.f32.mrf.mxu0
      %1839 = vmatprep.mubr.f32.mxu0 0.0
      %1840 = vmatmul.mubr.f32.gmra.mxu0 %v1676
      %v1841 = vpop.f32.mrf.mxu0
      %v1842 = vadd.f32 %v1668, %v1841
      %v1843 = vpop.f32.mrf.mxu0
      %1844 = vmatprep.mubr.f32.mxu0 0.0
      %1845 = vmatmul.mubr.f32.gmra.mxu0 %v1679
      %v1846 = vpop.f32.mrf.mxu0
      %v1847 = vadd.f32 %v1668, %v1846
      %v1848 = vpop.f32.mrf.mxu0
      %1849 = vmatprep.mubr.f32.mxu0 0.0
      %1850 = vmatmul.mubr.f32.gmra.mxu0 %v1682
      %v1851 = vpop.f32.mrf.mxu0
      %v1852 = vadd.f32 %v1668, %v1851
      %v1853 = vpop.f32.mrf.mxu0
      %1854 = vmatprep.mubr.f32.mxu0 0.0
      %1855 = vmatmul.mubr.f32.gmra.mxu0 %v1685
      %v1856 = vpop.f32.mrf.mxu0
      %v1857 = vadd.f32 %v1668, %v1856
      %v1858 = vpop.f32.mrf.mxu0
      %1859 = vmatprep.mubr.f32.mxu0 0.0
      %1860 = vmatmul.mubr.f32.gmra.mxu0 %v1688
      %v1861 = vpop.f32.mrf.mxu0
      %v1862 = vadd.f32 %v1668, %v1861
      %v1863 = vpop.f32.mrf.mxu0
      %1864 = vmatprep.mubr.f32.mxu0 0.0
      %1865 = vmatmul.mubr.f32.gmra.mxu0 %v1691
      %v1866 = vpop.f32.mrf.mxu0
      %v1867 = vadd.f32 %v1668, %v1866
      %v1868 = vpop.f32.mrf.mxu0
      %1869 = vmatprep.mubr.f32.mxu0 0.0
      %1870 = vmatmul.mubr.f32.gmra.mxu0 %v1694
      %v1871 = vpop.f32.mrf.mxu0
      %v1872 = vadd.f32 %v1668, %v1871
      %v1873 = vpop.f32.mrf.mxu0
      %1874 = vmatprep.mubr.f32.mxu0 0.0
      %1875 = vmatmul.mubr.f32.gmra.mxu0 %v1697
      %v1876 = vpop.f32.mrf.mxu0
      %v1877 = vadd.f32 %v1668, %v1876
      %v1878 = vpop.f32.mrf.mxu0
      %1879 = vmatprep.mubr.f32.mxu0 0.0
      %1880 = vmatmul.mubr.f32.gmra.mxu0 %v1700
      %v1881 = vpop.f32.mrf.mxu0
      %v1882 = vadd.f32 %v1668, %v1881
      %v1883 = vpop.f32.mrf.mxu0
      %1884 = vmatprep.mubr.f32.mxu0 0.0
      %1885 = vmatmul.mubr.f32.gmra.mxu0 %v1703
      %v1886 = vpop.f32.mrf.mxu0
      %v1887 = vadd.f32 %v1668, %v1886
      %v1888 = vpop.f32.mrf.mxu0
      %1889 = vmatprep.mubr.f32.mxu0 0.0
      %1890 = vmatmul.mubr.f32.gmra.mxu0 %v1706
      %v1891 = vpop.f32.mrf.mxu0
      %v1892 = vadd.f32 %v1668, %v1891
      %v1893 = vpop.f32.mrf.mxu0
      %1894 = vmatprep.mubr.f32.mxu0 0.0
      %1895 = vmatmul.mubr.f32.gmra.mxu0 %v1709
      %v1896 = vpop.f32.mrf.mxu0
      %v1897 = vadd.f32 %v1668, %v1896
      %v1898 = vpop.f32.mrf.mxu0
      %1899 = vmatprep.mubr.f32.mxu0 0.0
      %1900 = vmatmul.mubr.f32.gmra.mxu0 %v1712
      %v1901 = vpop.f32.mrf.mxu0
      %v1902 = vadd.f32 %v1668, %v1901
      %v1903 = vpop.f32.mrf.mxu0
      %1904 = vmatprep.mubr.f32.mxu0 0.0
      %1905 = vmatmul.mubr.f32.gmra.mxu0 %v1715
      %v1906 = vpop.f32.mrf.mxu0
      %v1907 = vadd.f32 %v1668, %v1906
      %v1908 = vpop.f32.mrf.mxu0
      %1909 = vmatprep.mubr.f32.mxu0 0.0
      %1910 = vmatmul.mubr.f32.gmra.mxu0 %v1718
      %v1911 = vpop.f32.mrf.mxu0
      %v1912 = vadd.f32 %v1668, %v1911
      %v1913 = vpop.f32.mrf.mxu0
      %1914 = vmatprep.mubr.f32.mxu0 0.0
      %1915 = vmatmul.mubr.f32.gmra.mxu0 %v1721
      %v1916 = vpop.f32.mrf.mxu0
      %v1917 = vadd.f32 %v1668, %v1916
      %v1918 = vpop.f32.mrf.mxu0
      %1919 = vmatprep.mubr.f32.mxu0 0.0
      %1920 = vmatmul.mubr.f32.gmra.mxu0 %v1724
      %v1921 = vpop.f32.mrf.mxu0
      %v1922 = vadd.f32 %v1668, %v1921
      %v1923 = vpop.f32.mrf.mxu0
      %1924 = vmatprep.mubr.f32.mxu0 0.0
      %1925 = vmatmul.mubr.f32.gmra.mxu0 %v1727
      %v1926 = vpop.f32.mrf.mxu0
      %v1927 = vadd.f32 %v1668, %v1926
      %v1928 = vpop.f32.mrf.mxu0
      %1929 = vmatprep.mubr.f32.mxu0 0.0
      %1930 = vmatmul.mubr.f32.gmra.mxu0 %v1730
      %v1931 = vpop.f32.mrf.mxu0
      %v1932 = vadd.f32 %v1668, %v1931
      %v1933 = vpop.f32.mrf.mxu0
      %1934 = vmatprep.mubr.f32.mxu0 0.0
      %1935 = vmatmul.mubr.f32.gmra.mxu0 %v1733
      %v1936 = vpop.f32.mrf.mxu0
      %v1937 = vadd.f32 %v1668, %v1936
      %v1938 = vpop.f32.mrf.mxu0
      %1939 = vmatprep.mubr.f32.mxu0 0.0
      %1940 = vmatmul.mubr.f32.gmra.mxu0 %v1736
      %v1941 = vpop.f32.mrf.mxu0
      %v1942 = vadd.f32 %v1668, %v1941
      %v1943 = vpop.f32.mrf.mxu0
      %1944 = vmatprep.mubr.f32.mxu0 0.0
      %1945 = vmatmul.mubr.f32.gmra.mxu0 %v1739
      %v1946 = vpop.f32.mrf.mxu0
      %v1947 = vadd.f32 %v1668, %v1946
      %v1948 = vpop.f32.mrf.mxu0
      %1949 = vmatprep.mubr.f32.mxu0 0.0
      %1950 = vmatmul.mubr.f32.gmra.mxu0 %v1742
      %v1951 = vpop.f32.mrf.mxu0
      %v1952 = vadd.f32 %v1668, %v1951
      %v1953 = vpop.f32.mrf.mxu0
      %1954 = vmatprep.mubr.f32.mxu0 0.0
      %1955 = vmatmul.mubr.f32.gmra.mxu0 %v1745
      %v1956 = vpop.f32.mrf.mxu0
      %v1957 = vadd.f32 %v1668, %v1956
      %v1958 = vpop.f32.mrf.mxu0
      %1959 = vmatprep.mubr.f32.mxu0 0.0
      %1960 = vmatmul.mubr.f32.gmra.mxu0 %v1748
      %v1961 = vpop.f32.mrf.mxu0
      %v1962 = vadd.f32 %v1668, %v1961
      %v1963 = vpop.f32.mrf.mxu0
      %1964 = vmatprep.mubr.f32.mxu0 0.0
      %1965 = vmatmul.mubr.f32.gmra.mxu0 %v1751
      %v1966 = vpop.f32.mrf.mxu0
      %v1967 = vadd.f32 %v1668, %v1966
      %v1968 = vpop.f32.mrf.mxu0
      %1969 = vmatprep.mubr.f32.mxu0 0.0
      %1970 = vmatmul.mubr.f32.gmra.mxu0 %v1754
      %v1971 = vpop.f32.mrf.mxu0
      %v1972 = vadd.f32 %v1668, %v1971
      %v1973 = vpop.f32.mrf.mxu0
      %1974 = vmatprep.mubr.f32.mxu0 0.0
      %1975 = vmatmul.mubr.f32.gmra.mxu0 %v1757
      %v1976 = vpop.f32.mrf.mxu0
      %v1977 = vadd.f32 %v1668, %v1976
      %v1978 = vpop.f32.mrf.mxu0
      %1979 = vmatprep.mubr.f32.mxu0 0.0
      %1980 = vmatmul.mubr.f32.gmra.mxu0 %v1760
      %v1981 = vpop.f32.mrf.mxu0
      %v1982 = vadd.f32 %v1668, %v1981
      %v1983 = vpop.f32.mrf.mxu0
      %1984 = vmatprep.mubr.f32.mxu0 0.0
      %1985 = vmatmul.mubr.f32.gmra.mxu0 %v1763
      %v1986 = vpop.f32.mrf.mxu0
      %v1987 = vadd.f32 %v1668, %v1986
      %v1988 = vpop.f32.mrf.mxu0
      %1989 = vdwg.mxu0
      %v1990 = vmax.f32 %v1832, 0.0
      %v1991 = vmax.f32 %v1837, 0.0
      %v1992 = vmax.f32 %v1842, 0.0
      %v1993 = vmax.f32 %v1847, 0.0
      %v1994 = vmax.f32 %v1852, 0.0
      %v1995 = vmax.f32 %v1857, 0.0
      %v1996 = vmax.f32 %v1862, 0.0
      %v1997 = vmax.f32 %v1867, 0.0
      %v1998 = vmax.f32 %v1872, 0.0
      %v1999 = vmax.f32 %v1877, 0.0
      %v2000 = vmax.f32 %v1882, 0.0
      %v2001 = vmax.f32 %v1887, 0.0
      %v2002 = vmax.f32 %v1892, 0.0
      %v2003 = vmax.f32 %v1897, 0.0
      %v2004 = vmax.f32 %v1902, 0.0
      %v2005 = vmax.f32 %v1907, 0.0
      %v2006 = vmax.f32 %v1912, 0.0
      %v2007 = vmax.f32 %v1917, 0.0
      %v2008 = vmax.f32 %v1922, 0.0
      %v2009 = vmax.f32 %v1927, 0.0
      %v2010 = vmax.f32 %v1932, 0.0
      %v2011 = vmax.f32 %v1937, 0.0
      %v2012 = vmax.f32 %v1942, 0.0
      %v2013 = vmax.f32 %v1947, 0.0
      %v2014 = vmax.f32 %v1952, 0.0
      %v2015 = vmax.f32 %v1957, 0.0
      %v2016 = vmax.f32 %v1962, 0.0
      %v2017 = vmax.f32 %v1967, 0.0
      %v2018 = vmax.f32 %v1972, 0.0
      %v2019 = vmax.f32 %v1977, 0.0
      %v2020 = vmax.f32 %v1982, 0.0
      %v2021 = vmax.f32 %v1987, 0.0
      %v2022 = vadd.f32 %v1990, %v1250
      %v2023 = vadd.f32 %v1991, %v1251
      %v2024 = vadd.f32 %v1992, %v1252
      %v2025 = vadd.f32 %v1993, %v1253
      %v2026 = vadd.f32 %v1994, %v1254
      %v2027 = vadd.f32 %v1995, %v1255
      %v2028 = vadd.f32 %v1996, %v1256
      %v2029 = vadd.f32 %v1997, %v1257
      %v2030 = vadd.f32 %v1998, %v1258
      %v2031 = vadd.f32 %v1999, %v1259
      %v2032 = vadd.f32 %v2000, %v1260
      %v2033 = vadd.f32 %v2001, %v1261
      %v2034 = vadd.f32 %v2002, %v1262
      %v2035 = vadd.f32 %v2003, %v1263
      %v2036 = vadd.f32 %v2004, %v1264
      %v2037 = vadd.f32 %v2005, %v1265
      %v2038 = vadd.f32 %v2006, %v1266
      %v2039 = vadd.f32 %v2007, %v1267
      %v2040 = vadd.f32 %v2008, %v1268
      %v2041 = vadd.f32 %v2009, %v1269
      %v2042 = vadd.f32 %v2010, %v1270
      %v2043 = vadd.f32 %v2011, %v1271
      %v2044 = vadd.f32 %v2012, %v1272
      %v2045 = vadd.f32 %v2013, %v1273
      %v2046 = vadd.f32 %v2014, %v1274
      %v2047 = vadd.f32 %v2015, %v1275
      %v2048 = vadd.f32 %v2016, %v1276
      %v2049 = vadd.f32 %v2017, %v1277
      %v2050 = vadd.f32 %v2018, %v1278
      %v2051 = vadd.f32 %v2019, %v1279
      %v2052 = vadd.f32 %v2020, %v1280
      %v2053 = vadd.f32 %v2021, %v1281
      %s2054 = scalar_lea.vmem %s3, 288
      %v2055 = vld [vmem:[%s2054] sm:$0xff]
      %v2056 = vld [vmem:[%s2054 + $0x8] sm:$0xff]
      %v2057 = vld [vmem:[%s2054 + $0x10] sm:$0xff]
      %v2058 = vld [vmem:[%s2054 + $0x18] sm:$0xff]
      %v2059 = vld [vmem:[%s2054 + $0x20] sm:$0xff]
      %v2060 = vld [vmem:[%s2054 + $0x28] sm:$0xff]
      %v2061 = vld [vmem:[%s2054 + $0x30] sm:$0xff]
      %v2062 = vld [vmem:[%s2054 + $0x38] sm:$0xff]
      %v2063 = vld [vmem:[%s2054 + $0x40] sm:$0xff]
      %v2064 = vld [vmem:[%s2054 + $0x48] sm:$0xff]
      %v2065 = vld [vmem:[%s2054 + $0x50] sm:$0xff]
      %v2066 = vld [vmem:[%s2054 + $0x58] sm:$0xff]
      %v2067 = vlaneseq
      %v2068 = vshrl.u32 %v2067, 7
      %v2069 = vsub.s32 4, %v2068
      %v2070 = vrot.slane %v287, %v2069
      %v2072 = vsel %vm896, %v2022, 0
      %v2075 = vsel %vm896, %v2023, 0
      %v2078 = vsel %vm896, %v2024, 0
      %v2081 = vsel %vm896, %v2025, 0
      %v2084 = vsel %vm896, %v2026, 0
      %v2087 = vsel %vm896, %v2027, 0
      %v2090 = vsel %vm896, %v2028, 0
      %v2093 = vsel %vm896, %v2029, 0
      %v2096 = vsel %vm896, %v2030, 0
      %v2099 = vsel %vm896, %v2031, 0
      %v2102 = vsel %vm896, %v2032, 0
      %v2105 = vsel %vm896, %v2033, 0
      %v2108 = vsel %vm896, %v2034, 0
      %v2111 = vsel %vm896, %v2035, 0
      %v2114 = vsel %vm896, %v2036, 0
      %v2117 = vsel %vm896, %v2037, 0
      %v2120 = vsel %vm896, %v2038, 0
      %v2123 = vsel %vm896, %v2039, 0
      %v2126 = vsel %vm896, %v2040, 0
      %v2129 = vsel %vm896, %v2041, 0
      %v2132 = vsel %vm896, %v2042, 0
      %v2135 = vsel %vm896, %v2043, 0
      %v2138 = vsel %vm896, %v2044, 0
      %v2141 = vsel %vm896, %v2045, 0
      %v2144 = vsel %vm896, %v2046, 0
      %v2147 = vsel %vm896, %v2047, 0
      %v2150 = vsel %vm896, %v2048, 0
      %v2153 = vsel %vm896, %v2049, 0
      %v2156 = vsel %vm896, %v2050, 0
      %v2159 = vsel %vm896, %v2051, 0
      %v2162 = vsel %vm896, %v2052, 0
      %v2165 = vsel %vm896, %v2053, 0
      %2167 = vmatprep.subr.mxu0 0.0
      %2168 = vmatpush1.msra.mxu0 0.0
      %2169 = vmatprep.subr.mxu0 0.0
      %2170 = vmatpush1.msra.mxu0 0.0
      %2171 = vmatprep.subr.mxu0 0.0
      %2172 = vmatpush1.msra.mxu0 0.0
      %2173 = vmatprep.subr.mxu0 0.0
      %2174 = vmatpush1.msra.mxu0 0.0
      %2175 = vmatprep.subr.mxu0 0.0
      %2176 = vmatpush1.msra.mxu0 %v2066
      %2177 = vmatprep.subr.mxu0 0.0
      %2178 = vmatpush1.msra.mxu0 %v2065
      %2179 = vmatprep.subr.mxu0 0.0
      %2180 = vmatpush1.msra.mxu0 %v2064
      %2181 = vmatprep.subr.mxu0 0.0
      %2182 = vmatpush1.msra.mxu0 %v2063
      %2183 = vmatprep.subr.mxu0 0.0
      %2184 = vmatpush1.msra.mxu0 %v2062
      %2185 = vmatprep.subr.mxu0 0.0
      %2186 = vmatpush1.msra.mxu0 %v2061
      %2187 = vmatprep.subr.mxu0 0.0
      %2188 = vmatpush1.msra.mxu0 %v2060
      %2189 = vmatprep.subr.mxu0 0.0
      %2190 = vmatpush1.msra.mxu0 %v2059
      %2191 = vmatprep.subr.mxu0 0.0
      %2192 = vmatpush1.msra.mxu0 %v2058
      %2193 = vmatprep.subr.mxu0 0.0
      %2194 = vmatpush1.msra.mxu0 %v2057
      %2195 = vmatprep.subr.mxu0 0.0
      %2196 = vmatpush1.msra.mxu0 %v2056
      %2197 = vmatprep.subr.mxu0 0.0
      %2198 = vmatpush1.msra.mxu0 %v2055
      %2199 = vmatprep.subr.mxu0 0.0
      %2200 = vmatpush2.msra.mxu0 0.0
      %2201 = vmatprep.subr.mxu0 0.0
      %2202 = vmatpush2.msra.mxu0 0.0
      %2203 = vmatprep.subr.mxu0 0.0
      %2204 = vmatpush2.msra.mxu0 0.0
      %2205 = vmatprep.subr.mxu0 0.0
      %2206 = vmatpush2.msra.mxu0 0.0
      %2207 = vmatprep.subr.mxu0 0.0
      %2208 = vmatpush2.msra.mxu0 0.0
      %2209 = vmatprep.subr.mxu0 0.0
      %2210 = vmatpush2.msra.mxu0 0.0
      %2211 = vmatprep.subr.mxu0 0.0
      %2212 = vmatpush2.msra.mxu0 0.0
      %2213 = vmatprep.subr.mxu0 0.0
      %2214 = vmatpush2.msra.mxu0 0.0
      %2215 = vmatprep.subr.mxu0 0.0
      %2216 = vmatpush2.msra.mxu0 0.0
      %2217 = vmatprep.subr.mxu0 0.0
      %2218 = vmatpush2.msra.mxu0 0.0
      %2219 = vmatprep.subr.mxu0 0.0
      %2220 = vmatpush2.msra.mxu0 0.0
      %2221 = vmatprep.subr.mxu0 0.0
      %2222 = vmatpush2.msra.mxu0 0.0
      %2223 = vmatprep.subr.mxu0 0.0
      %2224 = vmatpush2.msra.mxu0 0.0
      %2225 = vmatprep.subr.mxu0 0.0
      %2226 = vmatpush2.msra.mxu0 0.0
      %2227 = vmatprep.subr.mxu0 0.0
      %2228 = vmatpush2.msra.mxu0 0.0
      %2229 = vmatprep.subr.mxu0 0.0
      %2230 = vmatpush2.msra.mxu0 0.0
      %2231 = vmatprep.mubr.f32.mxu0 0.0
      %2232 = vmatmul.mubr.f32.gmra.mxu0 %v2072
      %v2233 = vpop.f32.mrf.mxu0
      %v2234 = vadd.f32 %v2070, %v2233
      %v2235 = vpop.f32.mrf.mxu0
      %2236 = vmatprep.mubr.f32.mxu0 0.0
      %2237 = vmatmul.mubr.f32.gmra.mxu0 %v2075
      %v2238 = vpop.f32.mrf.mxu0
      %v2239 = vadd.f32 %v2070, %v2238
      %v2240 = vpop.f32.mrf.mxu0
      %2241 = vmatprep.mubr.f32.mxu0 0.0
      %2242 = vmatmul.mubr.f32.gmra.mxu0 %v2078
      %v2243 = vpop.f32.mrf.mxu0
      %v2244 = vadd.f32 %v2070, %v2243
      %v2245 = vpop.f32.mrf.mxu0
      %2246 = vmatprep.mubr.f32.mxu0 0.0
      %2247 = vmatmul.mubr.f32.gmra.mxu0 %v2081
      %v2248 = vpop.f32.mrf.mxu0
      %v2249 = vadd.f32 %v2070, %v2248
      %v2250 = vpop.f32.mrf.mxu0
      %2251 = vmatprep.mubr.f32.mxu0 0.0
      %2252 = vmatmul.mubr.f32.gmra.mxu0 %v2084
      %v2253 = vpop.f32.mrf.mxu0
      %v2254 = vadd.f32 %v2070, %v2253
      %v2255 = vpop.f32.mrf.mxu0
      %2256 = vmatprep.mubr.f32.mxu0 0.0
      %2257 = vmatmul.mubr.f32.gmra.mxu0 %v2087
      %v2258 = vpop.f32.mrf.mxu0
      %v2259 = vadd.f32 %v2070, %v2258
      %v2260 = vpop.f32.mrf.mxu0
      %2261 = vmatprep.mubr.f32.mxu0 0.0
      %2262 = vmatmul.mubr.f32.gmra.mxu0 %v2090
      %v2263 = vpop.f32.mrf.mxu0
      %v2264 = vadd.f32 %v2070, %v2263
      %v2265 = vpop.f32.mrf.mxu0
      %2266 = vmatprep.mubr.f32.mxu0 0.0
      %2267 = vmatmul.mubr.f32.gmra.mxu0 %v2093
      %v2268 = vpop.f32.mrf.mxu0
      %v2269 = vadd.f32 %v2070, %v2268
      %v2270 = vpop.f32.mrf.mxu0
      %2271 = vmatprep.mubr.f32.mxu0 0.0
      %2272 = vmatmul.mubr.f32.gmra.mxu0 %v2096
      %v2273 = vpop.f32.mrf.mxu0
      %v2274 = vadd.f32 %v2070, %v2273
      %v2275 = vpop.f32.mrf.mxu0
      %2276 = vmatprep.mubr.f32.mxu0 0.0
      %2277 = vmatmul.mubr.f32.gmra.mxu0 %v2099
      %v2278 = vpop.f32.mrf.mxu0
      %v2279 = vadd.f32 %v2070, %v2278
      %v2280 = vpop.f32.mrf.mxu0
      %2281 = vmatprep.mubr.f32.mxu0 0.0
      %2282 = vmatmul.mubr.f32.gmra.mxu0 %v2102
      %v2283 = vpop.f32.mrf.mxu0
      %v2284 = vadd.f32 %v2070, %v2283
      %v2285 = vpop.f32.mrf.mxu0
      %2286 = vmatprep.mubr.f32.mxu0 0.0
      %2287 = vmatmul.mubr.f32.gmra.mxu0 %v2105
      %v2288 = vpop.f32.mrf.mxu0
      %v2289 = vadd.f32 %v2070, %v2288
      %v2290 = vpop.f32.mrf.mxu0
      %2291 = vmatprep.mubr.f32.mxu0 0.0
      %2292 = vmatmul.mubr.f32.gmra.mxu0 %v2108
      %v2293 = vpop.f32.mrf.mxu0
      %v2294 = vadd.f32 %v2070, %v2293
      %v2295 = vpop.f32.mrf.mxu0
      %2296 = vmatprep.mubr.f32.mxu0 0.0
      %2297 = vmatmul.mubr.f32.gmra.mxu0 %v2111
      %v2298 = vpop.f32.mrf.mxu0
      %v2299 = vadd.f32 %v2070, %v2298
      %v2300 = vpop.f32.mrf.mxu0
      %2301 = vmatprep.mubr.f32.mxu0 0.0
      %2302 = vmatmul.mubr.f32.gmra.mxu0 %v2114
      %v2303 = vpop.f32.mrf.mxu0
      %v2304 = vadd.f32 %v2070, %v2303
      %v2305 = vpop.f32.mrf.mxu0
      %2306 = vmatprep.mubr.f32.mxu0 0.0
      %2307 = vmatmul.mubr.f32.gmra.mxu0 %v2117
      %v2308 = vpop.f32.mrf.mxu0
      %v2309 = vadd.f32 %v2070, %v2308
      %v2310 = vpop.f32.mrf.mxu0
      %2311 = vmatprep.mubr.f32.mxu0 0.0
      %2312 = vmatmul.mubr.f32.gmra.mxu0 %v2120
      %v2313 = vpop.f32.mrf.mxu0
      %v2314 = vadd.f32 %v2070, %v2313
      %v2315 = vpop.f32.mrf.mxu0
      %2316 = vmatprep.mubr.f32.mxu0 0.0
      %2317 = vmatmul.mubr.f32.gmra.mxu0 %v2123
      %v2318 = vpop.f32.mrf.mxu0
      %v2319 = vadd.f32 %v2070, %v2318
      %v2320 = vpop.f32.mrf.mxu0
      %2321 = vmatprep.mubr.f32.mxu0 0.0
      %2322 = vmatmul.mubr.f32.gmra.mxu0 %v2126
      %v2323 = vpop.f32.mrf.mxu0
      %v2324 = vadd.f32 %v2070, %v2323
      %v2325 = vpop.f32.mrf.mxu0
      %2326 = vmatprep.mubr.f32.mxu0 0.0
      %2327 = vmatmul.mubr.f32.gmra.mxu0 %v2129
      %v2328 = vpop.f32.mrf.mxu0
      %v2329 = vadd.f32 %v2070, %v2328
      %v2330 = vpop.f32.mrf.mxu0
      %2331 = vmatprep.mubr.f32.mxu0 0.0
      %2332 = vmatmul.mubr.f32.gmra.mxu0 %v2132
      %v2333 = vpop.f32.mrf.mxu0
      %v2334 = vadd.f32 %v2070, %v2333
      %v2335 = vpop.f32.mrf.mxu0
      %2336 = vmatprep.mubr.f32.mxu0 0.0
      %2337 = vmatmul.mubr.f32.gmra.mxu0 %v2135
      %v2338 = vpop.f32.mrf.mxu0
      %v2339 = vadd.f32 %v2070, %v2338
      %v2340 = vpop.f32.mrf.mxu0
      %2341 = vmatprep.mubr.f32.mxu0 0.0
      %2342 = vmatmul.mubr.f32.gmra.mxu0 %v2138
      %v2343 = vpop.f32.mrf.mxu0
      %v2344 = vadd.f32 %v2070, %v2343
      %v2345 = vpop.f32.mrf.mxu0
      %2346 = vmatprep.mubr.f32.mxu0 0.0
      %2347 = vmatmul.mubr.f32.gmra.mxu0 %v2141
      %v2348 = vpop.f32.mrf.mxu0
      %v2349 = vadd.f32 %v2070, %v2348
      %v2350 = vpop.f32.mrf.mxu0
      %2351 = vmatprep.mubr.f32.mxu0 0.0
      %2352 = vmatmul.mubr.f32.gmra.mxu0 %v2144
      %v2353 = vpop.f32.mrf.mxu0
      %v2354 = vadd.f32 %v2070, %v2353
      %v2355 = vpop.f32.mrf.mxu0
      %2356 = vmatprep.mubr.f32.mxu0 0.0
      %2357 = vmatmul.mubr.f32.gmra.mxu0 %v2147
      %v2358 = vpop.f32.mrf.mxu0
      %v2359 = vadd.f32 %v2070, %v2358
      %v2360 = vpop.f32.mrf.mxu0
      %2361 = vmatprep.mubr.f32.mxu0 0.0
      %2362 = vmatmul.mubr.f32.gmra.mxu0 %v2150
      %v2363 = vpop.f32.mrf.mxu0
      %v2364 = vadd.f32 %v2070, %v2363
      %v2365 = vpop.f32.mrf.mxu0
      %2366 = vmatprep.mubr.f32.mxu0 0.0
      %2367 = vmatmul.mubr.f32.gmra.mxu0 %v2153
      %v2368 = vpop.f32.mrf.mxu0
      %v2369 = vadd.f32 %v2070, %v2368
      %v2370 = vpop.f32.mrf.mxu0
      %2371 = vmatprep.mubr.f32.mxu0 0.0
      %2372 = vmatmul.mubr.f32.gmra.mxu0 %v2156
      %v2373 = vpop.f32.mrf.mxu0
      %v2374 = vadd.f32 %v2070, %v2373
      %v2375 = vpop.f32.mrf.mxu0
      %2376 = vmatprep.mubr.f32.mxu0 0.0
      %2377 = vmatmul.mubr.f32.gmra.mxu0 %v2159
      %v2378 = vpop.f32.mrf.mxu0
      %v2379 = vadd.f32 %v2070, %v2378
      %v2380 = vpop.f32.mrf.mxu0
      %2381 = vmatprep.mubr.f32.mxu0 0.0
      %2382 = vmatmul.mubr.f32.gmra.mxu0 %v2162
      %v2383 = vpop.f32.mrf.mxu0
      %v2384 = vadd.f32 %v2070, %v2383
      %v2385 = vpop.f32.mrf.mxu0
      %2386 = vmatprep.mubr.f32.mxu0 0.0
      %2387 = vmatmul.mubr.f32.gmra.mxu0 %v2165
      %v2388 = vpop.f32.mrf.mxu0
      %v2389 = vadd.f32 %v2070, %v2388
      %v2390 = vpop.f32.mrf.mxu0
      %2391 = vdwg.mxu0
      %v2392 = vmax.f32 %v2234, 0.0
      %v2393 = vmax.f32 %v2239, 0.0
      %v2394 = vmax.f32 %v2244, 0.0
      %v2395 = vmax.f32 %v2249, 0.0
      %v2396 = vmax.f32 %v2254, 0.0
      %v2397 = vmax.f32 %v2259, 0.0
      %v2398 = vmax.f32 %v2264, 0.0
      %v2399 = vmax.f32 %v2269, 0.0
      %v2400 = vmax.f32 %v2274, 0.0
      %v2401 = vmax.f32 %v2279, 0.0
      %v2402 = vmax.f32 %v2284, 0.0
      %v2403 = vmax.f32 %v2289, 0.0
      %v2404 = vmax.f32 %v2294, 0.0
      %v2405 = vmax.f32 %v2299, 0.0
      %v2406 = vmax.f32 %v2304, 0.0
      %v2407 = vmax.f32 %v2309, 0.0
      %v2408 = vmax.f32 %v2314, 0.0
      %v2409 = vmax.f32 %v2319, 0.0
      %v2410 = vmax.f32 %v2324, 0.0
      %v2411 = vmax.f32 %v2329, 0.0
      %v2412 = vmax.f32 %v2334, 0.0
      %v2413 = vmax.f32 %v2339, 0.0
      %v2414 = vmax.f32 %v2344, 0.0
      %v2415 = vmax.f32 %v2349, 0.0
      %v2416 = vmax.f32 %v2354, 0.0
      %v2417 = vmax.f32 %v2359, 0.0
      %v2418 = vmax.f32 %v2364, 0.0
      %v2419 = vmax.f32 %v2369, 0.0
      %v2420 = vmax.f32 %v2374, 0.0
      %v2421 = vmax.f32 %v2379, 0.0
      %v2422 = vmax.f32 %v2384, 0.0
      %v2423 = vmax.f32 %v2389, 0.0
      %s2424 = scalar_lea.vmem %s3, 384
      %v2425 = vld [vmem:[%s2424] sm:$0xff]
      %v2426 = vld [vmem:[%s2424 + $0x8] sm:$0xff]
      %v2427 = vld [vmem:[%s2424 + $0x10] sm:$0xff]
      %v2428 = vld [vmem:[%s2424 + $0x18] sm:$0xff]
      %v2429 = vld [vmem:[%s2424 + $0x20] sm:$0xff]
      %v2430 = vld [vmem:[%s2424 + $0x28] sm:$0xff]
      %v2431 = vld [vmem:[%s2424 + $0x30] sm:$0xff]
      %v2432 = vld [vmem:[%s2424 + $0x38] sm:$0xff]
      %v2433 = vld [vmem:[%s2424 + $0x40] sm:$0xff]
      %v2434 = vld [vmem:[%s2424 + $0x48] sm:$0xff]
      %v2435 = vld [vmem:[%s2424 + $0x50] sm:$0xff]
      %v2436 = vld [vmem:[%s2424 + $0x58] sm:$0xff]
      %v2437 = vlaneseq
      %v2438 = vshrl.u32 %v2437, 7
      %v2439 = vsub.s32 5, %v2438
      %v2440 = vrot.slane %v287, %v2439
      %v2442 = vsel %vm896, %v2392, 0
      %v2445 = vsel %vm896, %v2393, 0
      %v2448 = vsel %vm896, %v2394, 0
      %v2451 = vsel %vm896, %v2395, 0
      %v2454 = vsel %vm896, %v2396, 0
      %v2457 = vsel %vm896, %v2397, 0
      %v2460 = vsel %vm896, %v2398, 0
      %v2463 = vsel %vm896, %v2399, 0
      %v2466 = vsel %vm896, %v2400, 0
      %v2469 = vsel %vm896, %v2401, 0
      %v2472 = vsel %vm896, %v2402, 0
      %v2475 = vsel %vm896, %v2403, 0
      %v2478 = vsel %vm896, %v2404, 0
      %v2481 = vsel %vm896, %v2405, 0
      %v2484 = vsel %vm896, %v2406, 0
      %v2487 = vsel %vm896, %v2407, 0
      %v2490 = vsel %vm896, %v2408, 0
      %v2493 = vsel %vm896, %v2409, 0
      %v2496 = vsel %vm896, %v2410, 0
      %v2499 = vsel %vm896, %v2411, 0
      %v2502 = vsel %vm896, %v2412, 0
      %v2505 = vsel %vm896, %v2413, 0
      %v2508 = vsel %vm896, %v2414, 0
      %v2511 = vsel %vm896, %v2415, 0
      %v2514 = vsel %vm896, %v2416, 0
      %v2517 = vsel %vm896, %v2417, 0
      %v2520 = vsel %vm896, %v2418, 0
      %v2523 = vsel %vm896, %v2419, 0
      %v2526 = vsel %vm896, %v2420, 0
      %v2529 = vsel %vm896, %v2421, 0
      %v2532 = vsel %vm896, %v2422, 0
      %v2535 = vsel %vm896, %v2423, 0
      %2537 = vmatprep.subr.mxu0 0.0
      %2538 = vmatpush1.msra.mxu0 0.0
      %2539 = vmatprep.subr.mxu0 0.0
      %2540 = vmatpush1.msra.mxu0 0.0
      %2541 = vmatprep.subr.mxu0 0.0
      %2542 = vmatpush1.msra.mxu0 0.0
      %2543 = vmatprep.subr.mxu0 0.0
      %2544 = vmatpush1.msra.mxu0 0.0
      %2545 = vmatprep.subr.mxu0 0.0
      %2546 = vmatpush1.msra.mxu0 %v2436
      %2547 = vmatprep.subr.mxu0 0.0
      %2548 = vmatpush1.msra.mxu0 %v2435
      %2549 = vmatprep.subr.mxu0 0.0
      %2550 = vmatpush1.msra.mxu0 %v2434
      %2551 = vmatprep.subr.mxu0 0.0
      %2552 = vmatpush1.msra.mxu0 %v2433
      %2553 = vmatprep.subr.mxu0 0.0
      %2554 = vmatpush1.msra.mxu0 %v2432
      %2555 = vmatprep.subr.mxu0 0.0
      %2556 = vmatpush1.msra.mxu0 %v2431
      %2557 = vmatprep.subr.mxu0 0.0
      %2558 = vmatpush1.msra.mxu0 %v2430
      %2559 = vmatprep.subr.mxu0 0.0
      %2560 = vmatpush1.msra.mxu0 %v2429
      %2561 = vmatprep.subr.mxu0 0.0
      %2562 = vmatpush1.msra.mxu0 %v2428
      %2563 = vmatprep.subr.mxu0 0.0
      %2564 = vmatpush1.msra.mxu0 %v2427
      %2565 = vmatprep.subr.mxu0 0.0
      %2566 = vmatpush1.msra.mxu0 %v2426
      %2567 = vmatprep.subr.mxu0 0.0
      %2568 = vmatpush1.msra.mxu0 %v2425
      %2569 = vmatprep.subr.mxu0 0.0
      %2570 = vmatpush2.msra.mxu0 0.0
      %2571 = vmatprep.subr.mxu0 0.0
      %2572 = vmatpush2.msra.mxu0 0.0
      %2573 = vmatprep.subr.mxu0 0.0
      %2574 = vmatpush2.msra.mxu0 0.0
      %2575 = vmatprep.subr.mxu0 0.0
      %2576 = vmatpush2.msra.mxu0 0.0
      %2577 = vmatprep.subr.mxu0 0.0
      %2578 = vmatpush2.msra.mxu0 0.0
      %2579 = vmatprep.subr.mxu0 0.0
      %2580 = vmatpush2.msra.mxu0 0.0
      %2581 = vmatprep.subr.mxu0 0.0
      %2582 = vmatpush2.msra.mxu0 0.0
      %2583 = vmatprep.subr.mxu0 0.0
      %2584 = vmatpush2.msra.mxu0 0.0
      %2585 = vmatprep.subr.mxu0 0.0
      %2586 = vmatpush2.msra.mxu0 0.0
      %2587 = vmatprep.subr.mxu0 0.0
      %2588 = vmatpush2.msra.mxu0 0.0
      %2589 = vmatprep.subr.mxu0 0.0
      %2590 = vmatpush2.msra.mxu0 0.0
      %2591 = vmatprep.subr.mxu0 0.0
      %2592 = vmatpush2.msra.mxu0 0.0
      %2593 = vmatprep.subr.mxu0 0.0
      %2594 = vmatpush2.msra.mxu0 0.0
      %2595 = vmatprep.subr.mxu0 0.0
      %2596 = vmatpush2.msra.mxu0 0.0
      %2597 = vmatprep.subr.mxu0 0.0
      %2598 = vmatpush2.msra.mxu0 0.0
      %2599 = vmatprep.subr.mxu0 0.0
      %2600 = vmatpush2.msra.mxu0 0.0
      %2601 = vmatprep.mubr.f32.mxu0 0.0
      %2602 = vmatmul.mubr.f32.gmra.mxu0 %v2442
      %v2603 = vpop.f32.mrf.mxu0
      %v2604 = vadd.f32 %v2440, %v2603
      %v2605 = vpop.f32.mrf.mxu0
      %2606 = vmatprep.mubr.f32.mxu0 0.0
      %2607 = vmatmul.mubr.f32.gmra.mxu0 %v2445
      %v2608 = vpop.f32.mrf.mxu0
      %v2609 = vadd.f32 %v2440, %v2608
      %v2610 = vpop.f32.mrf.mxu0
      %2611 = vmatprep.mubr.f32.mxu0 0.0
      %2612 = vmatmul.mubr.f32.gmra.mxu0 %v2448
      %v2613 = vpop.f32.mrf.mxu0
      %v2614 = vadd.f32 %v2440, %v2613
      %v2615 = vpop.f32.mrf.mxu0
      %2616 = vmatprep.mubr.f32.mxu0 0.0
      %2617 = vmatmul.mubr.f32.gmra.mxu0 %v2451
      %v2618 = vpop.f32.mrf.mxu0
      %v2619 = vadd.f32 %v2440, %v2618
      %v2620 = vpop.f32.mrf.mxu0
      %2621 = vmatprep.mubr.f32.mxu0 0.0
      %2622 = vmatmul.mubr.f32.gmra.mxu0 %v2454
      %v2623 = vpop.f32.mrf.mxu0
      %v2624 = vadd.f32 %v2440, %v2623
      %v2625 = vpop.f32.mrf.mxu0
      %2626 = vmatprep.mubr.f32.mxu0 0.0
      %2627 = vmatmul.mubr.f32.gmra.mxu0 %v2457
      %v2628 = vpop.f32.mrf.mxu0
      %v2629 = vadd.f32 %v2440, %v2628
      %v2630 = vpop.f32.mrf.mxu0
      %2631 = vmatprep.mubr.f32.mxu0 0.0
      %2632 = vmatmul.mubr.f32.gmra.mxu0 %v2460
      %v2633 = vpop.f32.mrf.mxu0
      %v2634 = vadd.f32 %v2440, %v2633
      %v2635 = vpop.f32.mrf.mxu0
      %2636 = vmatprep.mubr.f32.mxu0 0.0
      %2637 = vmatmul.mubr.f32.gmra.mxu0 %v2463
      %v2638 = vpop.f32.mrf.mxu0
      %v2639 = vadd.f32 %v2440, %v2638
      %v2640 = vpop.f32.mrf.mxu0
      %2641 = vmatprep.mubr.f32.mxu0 0.0
      %2642 = vmatmul.mubr.f32.gmra.mxu0 %v2466
      %v2643 = vpop.f32.mrf.mxu0
      %v2644 = vadd.f32 %v2440, %v2643
      %v2645 = vpop.f32.mrf.mxu0
      %2646 = vmatprep.mubr.f32.mxu0 0.0
      %2647 = vmatmul.mubr.f32.gmra.mxu0 %v2469
      %v2648 = vpop.f32.mrf.mxu0
      %v2649 = vadd.f32 %v2440, %v2648
      %v2650 = vpop.f32.mrf.mxu0
      %2651 = vmatprep.mubr.f32.mxu0 0.0
      %2652 = vmatmul.mubr.f32.gmra.mxu0 %v2472
      %v2653 = vpop.f32.mrf.mxu0
      %v2654 = vadd.f32 %v2440, %v2653
      %v2655 = vpop.f32.mrf.mxu0
      %2656 = vmatprep.mubr.f32.mxu0 0.0
      %2657 = vmatmul.mubr.f32.gmra.mxu0 %v2475
      %v2658 = vpop.f32.mrf.mxu0
      %v2659 = vadd.f32 %v2440, %v2658
      %v2660 = vpop.f32.mrf.mxu0
      %2661 = vmatprep.mubr.f32.mxu0 0.0
      %2662 = vmatmul.mubr.f32.gmra.mxu0 %v2478
      %v2663 = vpop.f32.mrf.mxu0
      %v2664 = vadd.f32 %v2440, %v2663
      %v2665 = vpop.f32.mrf.mxu0
      %2666 = vmatprep.mubr.f32.mxu0 0.0
      %2667 = vmatmul.mubr.f32.gmra.mxu0 %v2481
      %v2668 = vpop.f32.mrf.mxu0
      %v2669 = vadd.f32 %v2440, %v2668
      %v2670 = vpop.f32.mrf.mxu0
      %2671 = vmatprep.mubr.f32.mxu0 0.0
      %2672 = vmatmul.mubr.f32.gmra.mxu0 %v2484
      %v2673 = vpop.f32.mrf.mxu0
      %v2674 = vadd.f32 %v2440, %v2673
      %v2675 = vpop.f32.mrf.mxu0
      %2676 = vmatprep.mubr.f32.mxu0 0.0
      %2677 = vmatmul.mubr.f32.gmra.mxu0 %v2487
      %v2678 = vpop.f32.mrf.mxu0
      %v2679 = vadd.f32 %v2440, %v2678
      %v2680 = vpop.f32.mrf.mxu0
      %2681 = vmatprep.mubr.f32.mxu0 0.0
      %2682 = vmatmul.mubr.f32.gmra.mxu0 %v2490
      %v2683 = vpop.f32.mrf.mxu0
      %v2684 = vadd.f32 %v2440, %v2683
      %v2685 = vpop.f32.mrf.mxu0
      %2686 = vmatprep.mubr.f32.mxu0 0.0
      %2687 = vmatmul.mubr.f32.gmra.mxu0 %v2493
      %v2688 = vpop.f32.mrf.mxu0
      %v2689 = vadd.f32 %v2440, %v2688
      %v2690 = vpop.f32.mrf.mxu0
      %2691 = vmatprep.mubr.f32.mxu0 0.0
      %2692 = vmatmul.mubr.f32.gmra.mxu0 %v2496
      %v2693 = vpop.f32.mrf.mxu0
      %v2694 = vadd.f32 %v2440, %v2693
      %v2695 = vpop.f32.mrf.mxu0
      %2696 = vmatprep.mubr.f32.mxu0 0.0
      %2697 = vmatmul.mubr.f32.gmra.mxu0 %v2499
      %v2698 = vpop.f32.mrf.mxu0
      %v2699 = vadd.f32 %v2440, %v2698
      %v2700 = vpop.f32.mrf.mxu0
      %2701 = vmatprep.mubr.f32.mxu0 0.0
      %2702 = vmatmul.mubr.f32.gmra.mxu0 %v2502
      %v2703 = vpop.f32.mrf.mxu0
      %v2704 = vadd.f32 %v2440, %v2703
      %v2705 = vpop.f32.mrf.mxu0
      %2706 = vmatprep.mubr.f32.mxu0 0.0
      %2707 = vmatmul.mubr.f32.gmra.mxu0 %v2505
      %v2708 = vpop.f32.mrf.mxu0
      %v2709 = vadd.f32 %v2440, %v2708
      %v2710 = vpop.f32.mrf.mxu0
      %2711 = vmatprep.mubr.f32.mxu0 0.0
      %2712 = vmatmul.mubr.f32.gmra.mxu0 %v2508
      %v2713 = vpop.f32.mrf.mxu0
      %v2714 = vadd.f32 %v2440, %v2713
      %v2715 = vpop.f32.mrf.mxu0
      %2716 = vmatprep.mubr.f32.mxu0 0.0
      %2717 = vmatmul.mubr.f32.gmra.mxu0 %v2511
      %v2718 = vpop.f32.mrf.mxu0
      %v2719 = vadd.f32 %v2440, %v2718
      %v2720 = vpop.f32.mrf.mxu0
      %2721 = vmatprep.mubr.f32.mxu0 0.0
      %2722 = vmatmul.mubr.f32.gmra.mxu0 %v2514
      %v2723 = vpop.f32.mrf.mxu0
      %v2724 = vadd.f32 %v2440, %v2723
      %v2725 = vpop.f32.mrf.mxu0
      %2726 = vmatprep.mubr.f32.mxu0 0.0
      %2727 = vmatmul.mubr.f32.gmra.mxu0 %v2517
      %v2728 = vpop.f32.mrf.mxu0
      %v2729 = vadd.f32 %v2440, %v2728
      %v2730 = vpop.f32.mrf.mxu0
      %2731 = vmatprep.mubr.f32.mxu0 0.0
      %2732 = vmatmul.mubr.f32.gmra.mxu0 %v2520
      %v2733 = vpop.f32.mrf.mxu0
      %v2734 = vadd.f32 %v2440, %v2733
      %v2735 = vpop.f32.mrf.mxu0
      %2736 = vmatprep.mubr.f32.mxu0 0.0
      %2737 = vmatmul.mubr.f32.gmra.mxu0 %v2523
      %v2738 = vpop.f32.mrf.mxu0
      %v2739 = vadd.f32 %v2440, %v2738
      %v2740 = vpop.f32.mrf.mxu0
      %2741 = vmatprep.mubr.f32.mxu0 0.0
      %2742 = vmatmul.mubr.f32.gmra.mxu0 %v2526
      %v2743 = vpop.f32.mrf.mxu0
      %v2744 = vadd.f32 %v2440, %v2743
      %v2745 = vpop.f32.mrf.mxu0
      %2746 = vmatprep.mubr.f32.mxu0 0.0
      %2747 = vmatmul.mubr.f32.gmra.mxu0 %v2529
      %v2748 = vpop.f32.mrf.mxu0
      %v2749 = vadd.f32 %v2440, %v2748
      %v2750 = vpop.f32.mrf.mxu0
      %2751 = vmatprep.mubr.f32.mxu0 0.0
      %2752 = vmatmul.mubr.f32.gmra.mxu0 %v2532
      %v2753 = vpop.f32.mrf.mxu0
      %v2754 = vadd.f32 %v2440, %v2753
      %v2755 = vpop.f32.mrf.mxu0
      %2756 = vmatprep.mubr.f32.mxu0 0.0
      %2757 = vmatmul.mubr.f32.gmra.mxu0 %v2535
      %v2758 = vpop.f32.mrf.mxu0
      %v2759 = vadd.f32 %v2440, %v2758
      %v2760 = vpop.f32.mrf.mxu0
      %2761 = vdwg.mxu0
      %v2762 = vmax.f32 %v2604, 0.0
      %v2763 = vmax.f32 %v2609, 0.0
      %v2764 = vmax.f32 %v2614, 0.0
      %v2765 = vmax.f32 %v2619, 0.0
      %v2766 = vmax.f32 %v2624, 0.0
      %v2767 = vmax.f32 %v2629, 0.0
      %v2768 = vmax.f32 %v2634, 0.0
      %v2769 = vmax.f32 %v2639, 0.0
      %v2770 = vmax.f32 %v2644, 0.0
      %v2771 = vmax.f32 %v2649, 0.0
      %v2772 = vmax.f32 %v2654, 0.0
      %v2773 = vmax.f32 %v2659, 0.0
      %v2774 = vmax.f32 %v2664, 0.0
      %v2775 = vmax.f32 %v2669, 0.0
      %v2776 = vmax.f32 %v2674, 0.0
      %v2777 = vmax.f32 %v2679, 0.0
      %v2778 = vmax.f32 %v2684, 0.0
      %v2779 = vmax.f32 %v2689, 0.0
      %v2780 = vmax.f32 %v2694, 0.0
      %v2781 = vmax.f32 %v2699, 0.0
      %v2782 = vmax.f32 %v2704, 0.0
      %v2783 = vmax.f32 %v2709, 0.0
      %v2784 = vmax.f32 %v2714, 0.0
      %v2785 = vmax.f32 %v2719, 0.0
      %v2786 = vmax.f32 %v2724, 0.0
      %v2787 = vmax.f32 %v2729, 0.0
      %v2788 = vmax.f32 %v2734, 0.0
      %v2789 = vmax.f32 %v2739, 0.0
      %v2790 = vmax.f32 %v2744, 0.0
      %v2791 = vmax.f32 %v2749, 0.0
      %v2792 = vmax.f32 %v2754, 0.0
      %v2793 = vmax.f32 %v2759, 0.0
      %v2794 = vadd.f32 %v2762, %v2022
      %v2795 = vadd.f32 %v2763, %v2023
      %v2796 = vadd.f32 %v2764, %v2024
      %v2797 = vadd.f32 %v2765, %v2025
      %v2798 = vadd.f32 %v2766, %v2026
      %v2799 = vadd.f32 %v2767, %v2027
      %v2800 = vadd.f32 %v2768, %v2028
      %v2801 = vadd.f32 %v2769, %v2029
      %v2802 = vadd.f32 %v2770, %v2030
      %v2803 = vadd.f32 %v2771, %v2031
      %v2804 = vadd.f32 %v2772, %v2032
      %v2805 = vadd.f32 %v2773, %v2033
      %v2806 = vadd.f32 %v2774, %v2034
      %v2807 = vadd.f32 %v2775, %v2035
      %v2808 = vadd.f32 %v2776, %v2036
      %v2809 = vadd.f32 %v2777, %v2037
      %v2810 = vadd.f32 %v2778, %v2038
      %v2811 = vadd.f32 %v2779, %v2039
      %v2812 = vadd.f32 %v2780, %v2040
      %v2813 = vadd.f32 %v2781, %v2041
      %v2814 = vadd.f32 %v2782, %v2042
      %v2815 = vadd.f32 %v2783, %v2043
      %v2816 = vadd.f32 %v2784, %v2044
      %v2817 = vadd.f32 %v2785, %v2045
      %v2818 = vadd.f32 %v2786, %v2046
      %v2819 = vadd.f32 %v2787, %v2047
      %v2820 = vadd.f32 %v2788, %v2048
      %v2821 = vadd.f32 %v2789, %v2049
      %v2822 = vadd.f32 %v2790, %v2050
      %v2823 = vadd.f32 %v2791, %v2051
      %v2824 = vadd.f32 %v2792, %v2052
      %v2825 = vadd.f32 %v2793, %v2053
      %v2826 = vld [vmem:[%s5] sm:$0xff]
      %v2827 = vld [vmem:[%s5 + $0x8] sm:$0xff]
      %v2828 = vld [vmem:[%s5 + $0x10] sm:$0xff]
      %v2829 = vld [vmem:[%s5 + $0x18] sm:$0xff]
      %v2830 = vld [vmem:[%s5 + $0x20] sm:$0xff]
      %v2831 = vld [vmem:[%s5 + $0x28] sm:$0xff]
      %v2832 = vld [vmem:[%s5 + $0x30] sm:$0xff]
      %v2833 = vld [vmem:[%s5 + $0x38] sm:$0xff]
      %v2834 = vld [vmem:[%s5 + $0x40] sm:$0xff]
      %v2835 = vld [vmem:[%s5 + $0x48] sm:$0xff]
      %v2836 = vld [vmem:[%s5 + $0x50] sm:$0xff]
      %v2837 = vld [vmem:[%s5 + $0x58] sm:$0xff]
      %v2839 = vsel %vm896, %v2794, 0
      %v2842 = vsel %vm896, %v2795, 0
      %v2845 = vsel %vm896, %v2796, 0
      %v2848 = vsel %vm896, %v2797, 0
      %v2851 = vsel %vm896, %v2798, 0
      %v2854 = vsel %vm896, %v2799, 0
      %v2857 = vsel %vm896, %v2800, 0
      %v2860 = vsel %vm896, %v2801, 0
      %v2863 = vsel %vm896, %v2802, 0
      %v2866 = vsel %vm896, %v2803, 0
      %v2869 = vsel %vm896, %v2804, 0
      %v2872 = vsel %vm896, %v2805, 0
      %v2875 = vsel %vm896, %v2806, 0
      %v2878 = vsel %vm896, %v2807, 0
      %v2881 = vsel %vm896, %v2808, 0
      %v2884 = vsel %vm896, %v2809, 0
      %v2887 = vsel %vm896, %v2810, 0
      %v2890 = vsel %vm896, %v2811, 0
      %v2893 = vsel %vm896, %v2812, 0
      %v2896 = vsel %vm896, %v2813, 0
      %v2899 = vsel %vm896, %v2814, 0
      %v2902 = vsel %vm896, %v2815, 0
      %v2905 = vsel %vm896, %v2816, 0
      %v2908 = vsel %vm896, %v2817, 0
      %v2911 = vsel %vm896, %v2818, 0
      %v2914 = vsel %vm896, %v2819, 0
      %v2917 = vsel %vm896, %v2820, 0
      %v2920 = vsel %vm896, %v2821, 0
      %v2923 = vsel %vm896, %v2822, 0
      %v2926 = vsel %vm896, %v2823, 0
      %v2929 = vsel %vm896, %v2824, 0
      %v2932 = vsel %vm896, %v2825, 0
      %2934 = vmatprep.subr.mxu0 0.0
      %2935 = vmatpush1.msra.mxu0 0.0
      %2936 = vmatprep.subr.mxu0 0.0
      %2937 = vmatpush1.msra.mxu0 0.0
      %2938 = vmatprep.subr.mxu0 0.0
      %2939 = vmatpush1.msra.mxu0 0.0
      %2940 = vmatprep.subr.mxu0 0.0
      %2941 = vmatpush1.msra.mxu0 0.0
      %2942 = vmatprep.subr.mxu0 0.0
      %2943 = vmatpush1.msra.mxu0 %v2837
      %2944 = vmatprep.subr.mxu0 0.0
      %2945 = vmatpush1.msra.mxu0 %v2836
      %2946 = vmatprep.subr.mxu0 0.0
      %2947 = vmatpush1.msra.mxu0 %v2835
      %2948 = vmatprep.subr.mxu0 0.0
      %2949 = vmatpush1.msra.mxu0 %v2834
      %2950 = vmatprep.subr.mxu0 0.0
      %2951 = vmatpush1.msra.mxu0 %v2833
      %2952 = vmatprep.subr.mxu0 0.0
      %2953 = vmatpush1.msra.mxu0 %v2832
      %2954 = vmatprep.subr.mxu0 0.0
      %2955 = vmatpush1.msra.mxu0 %v2831
      %2956 = vmatprep.subr.mxu0 0.0
      %2957 = vmatpush1.msra.mxu0 %v2830
      %2958 = vmatprep.subr.mxu0 0.0
      %2959 = vmatpush1.msra.mxu0 %v2829
      %2960 = vmatprep.subr.mxu0 0.0
      %2961 = vmatpush1.msra.mxu0 %v2828
      %2962 = vmatprep.subr.mxu0 0.0
      %2963 = vmatpush1.msra.mxu0 %v2827
      %2964 = vmatprep.subr.mxu0 0.0
      %2965 = vmatpush1.msra.mxu0 %v2826
      %2966 = vmatprep.subr.mxu0 0.0
      %2967 = vmatpush2.msra.mxu0 0.0
      %2968 = vmatprep.subr.mxu0 0.0
      %2969 = vmatpush2.msra.mxu0 0.0
      %2970 = vmatprep.subr.mxu0 0.0
      %2971 = vmatpush2.msra.mxu0 0.0
      %2972 = vmatprep.subr.mxu0 0.0
      %2973 = vmatpush2.msra.mxu0 0.0
      %2974 = vmatprep.subr.mxu0 0.0
      %2975 = vmatpush2.msra.mxu0 0.0
      %2976 = vmatprep.subr.mxu0 0.0
      %2977 = vmatpush2.msra.mxu0 0.0
      %2978 = vmatprep.subr.mxu0 0.0
      %2979 = vmatpush2.msra.mxu0 0.0
      %2980 = vmatprep.subr.mxu0 0.0
      %2981 = vmatpush2.msra.mxu0 0.0
      %2982 = vmatprep.subr.mxu0 0.0
      %2983 = vmatpush2.msra.mxu0 0.0
      %2984 = vmatprep.subr.mxu0 0.0
      %2985 = vmatpush2.msra.mxu0 0.0
      %2986 = vmatprep.subr.mxu0 0.0
      %2987 = vmatpush2.msra.mxu0 0.0
      %2988 = vmatprep.subr.mxu0 0.0
      %2989 = vmatpush2.msra.mxu0 0.0
      %2990 = vmatprep.subr.mxu0 0.0
      %2991 = vmatpush2.msra.mxu0 0.0
      %2992 = vmatprep.subr.mxu0 0.0
      %2993 = vmatpush2.msra.mxu0 0.0
      %2994 = vmatprep.subr.mxu0 0.0
      %2995 = vmatpush2.msra.mxu0 0.0
      %2996 = vmatprep.subr.mxu0 0.0
      %2997 = vmatpush2.msra.mxu0 0.0
      %2998 = vmatprep.mubr.f32.mxu0 0.0
      %2999 = vmatmul.mubr.f32.gmra.mxu0 %v2839
      %v3000 = vpop.f32.mrf.mxu0
      %v3001 = vadd.f32 0.0, %v3000
      %v3002 = vpop.f32.mrf.mxu0
      %3003 = vmatprep.mubr.f32.mxu0 0.0
      %3004 = vmatmul.mubr.f32.gmra.mxu0 %v2842
      %v3005 = vpop.f32.mrf.mxu0
      %v3006 = vadd.f32 0.0, %v3005
      %v3007 = vpop.f32.mrf.mxu0
      %3008 = vmatprep.mubr.f32.mxu0 0.0
      %3009 = vmatmul.mubr.f32.gmra.mxu0 %v2845
      %v3010 = vpop.f32.mrf.mxu0
      %v3011 = vadd.f32 0.0, %v3010
      %v3012 = vpop.f32.mrf.mxu0
      %3013 = vmatprep.mubr.f32.mxu0 0.0
      %3014 = vmatmul.mubr.f32.gmra.mxu0 %v2848
      %v3015 = vpop.f32.mrf.mxu0
      %v3016 = vadd.f32 0.0, %v3015
      %v3017 = vpop.f32.mrf.mxu0
      %3018 = vmatprep.mubr.f32.mxu0 0.0
      %3019 = vmatmul.mubr.f32.gmra.mxu0 %v2851
      %v3020 = vpop.f32.mrf.mxu0
      %v3021 = vadd.f32 0.0, %v3020
      %v3022 = vpop.f32.mrf.mxu0
      %3023 = vmatprep.mubr.f32.mxu0 0.0
      %3024 = vmatmul.mubr.f32.gmra.mxu0 %v2854
      %v3025 = vpop.f32.mrf.mxu0
      %v3026 = vadd.f32 0.0, %v3025
      %v3027 = vpop.f32.mrf.mxu0
      %3028 = vmatprep.mubr.f32.mxu0 0.0
      %3029 = vmatmul.mubr.f32.gmra.mxu0 %v2857
      %v3030 = vpop.f32.mrf.mxu0
      %v3031 = vadd.f32 0.0, %v3030
      %v3032 = vpop.f32.mrf.mxu0
      %3033 = vmatprep.mubr.f32.mxu0 0.0
      %3034 = vmatmul.mubr.f32.gmra.mxu0 %v2860
      %v3035 = vpop.f32.mrf.mxu0
      %v3036 = vadd.f32 0.0, %v3035
      %v3037 = vpop.f32.mrf.mxu0
      %3038 = vmatprep.mubr.f32.mxu0 0.0
      %3039 = vmatmul.mubr.f32.gmra.mxu0 %v2863
      %v3040 = vpop.f32.mrf.mxu0
      %v3041 = vadd.f32 0.0, %v3040
      %v3042 = vpop.f32.mrf.mxu0
      %3043 = vmatprep.mubr.f32.mxu0 0.0
      %3044 = vmatmul.mubr.f32.gmra.mxu0 %v2866
      %v3045 = vpop.f32.mrf.mxu0
      %v3046 = vadd.f32 0.0, %v3045
      %v3047 = vpop.f32.mrf.mxu0
      %3048 = vmatprep.mubr.f32.mxu0 0.0
      %3049 = vmatmul.mubr.f32.gmra.mxu0 %v2869
      %v3050 = vpop.f32.mrf.mxu0
      %v3051 = vadd.f32 0.0, %v3050
      %v3052 = vpop.f32.mrf.mxu0
      %3053 = vmatprep.mubr.f32.mxu0 0.0
      %3054 = vmatmul.mubr.f32.gmra.mxu0 %v2872
      %v3055 = vpop.f32.mrf.mxu0
      %v3056 = vadd.f32 0.0, %v3055
      %v3057 = vpop.f32.mrf.mxu0
      %3058 = vmatprep.mubr.f32.mxu0 0.0
      %3059 = vmatmul.mubr.f32.gmra.mxu0 %v2875
      %v3060 = vpop.f32.mrf.mxu0
      %v3061 = vadd.f32 0.0, %v3060
      %v3062 = vpop.f32.mrf.mxu0
      %3063 = vmatprep.mubr.f32.mxu0 0.0
      %3064 = vmatmul.mubr.f32.gmra.mxu0 %v2878
      %v3065 = vpop.f32.mrf.mxu0
      %v3066 = vadd.f32 0.0, %v3065
      %v3067 = vpop.f32.mrf.mxu0
      %3068 = vmatprep.mubr.f32.mxu0 0.0
      %3069 = vmatmul.mubr.f32.gmra.mxu0 %v2881
      %v3070 = vpop.f32.mrf.mxu0
      %v3071 = vadd.f32 0.0, %v3070
      %v3072 = vpop.f32.mrf.mxu0
      %3073 = vmatprep.mubr.f32.mxu0 0.0
      %3074 = vmatmul.mubr.f32.gmra.mxu0 %v2884
      %v3075 = vpop.f32.mrf.mxu0
      %v3076 = vadd.f32 0.0, %v3075
      %v3077 = vpop.f32.mrf.mxu0
      %3078 = vmatprep.mubr.f32.mxu0 0.0
      %3079 = vmatmul.mubr.f32.gmra.mxu0 %v2887
      %v3080 = vpop.f32.mrf.mxu0
      %v3081 = vadd.f32 0.0, %v3080
      %v3082 = vpop.f32.mrf.mxu0
      %3083 = vmatprep.mubr.f32.mxu0 0.0
      %3084 = vmatmul.mubr.f32.gmra.mxu0 %v2890
      %v3085 = vpop.f32.mrf.mxu0
      %v3086 = vadd.f32 0.0, %v3085
      %v3087 = vpop.f32.mrf.mxu0
      %3088 = vmatprep.mubr.f32.mxu0 0.0
      %3089 = vmatmul.mubr.f32.gmra.mxu0 %v2893
      %v3090 = vpop.f32.mrf.mxu0
      %v3091 = vadd.f32 0.0, %v3090
      %v3092 = vpop.f32.mrf.mxu0
      %3093 = vmatprep.mubr.f32.mxu0 0.0
      %3094 = vmatmul.mubr.f32.gmra.mxu0 %v2896
      %v3095 = vpop.f32.mrf.mxu0
      %v3096 = vadd.f32 0.0, %v3095
      %v3097 = vpop.f32.mrf.mxu0
      %3098 = vmatprep.mubr.f32.mxu0 0.0
      %3099 = vmatmul.mubr.f32.gmra.mxu0 %v2899
      %v3100 = vpop.f32.mrf.mxu0
      %v3101 = vadd.f32 0.0, %v3100
      %v3102 = vpop.f32.mrf.mxu0
      %3103 = vmatprep.mubr.f32.mxu0 0.0
      %3104 = vmatmul.mubr.f32.gmra.mxu0 %v2902
      %v3105 = vpop.f32.mrf.mxu0
      %v3106 = vadd.f32 0.0, %v3105
      %v3107 = vpop.f32.mrf.mxu0
      %3108 = vmatprep.mubr.f32.mxu0 0.0
      %3109 = vmatmul.mubr.f32.gmra.mxu0 %v2905
      %v3110 = vpop.f32.mrf.mxu0
      %v3111 = vadd.f32 0.0, %v3110
      %v3112 = vpop.f32.mrf.mxu0
      %3113 = vmatprep.mubr.f32.mxu0 0.0
      %3114 = vmatmul.mubr.f32.gmra.mxu0 %v2908
      %v3115 = vpop.f32.mrf.mxu0
      %v3116 = vadd.f32 0.0, %v3115
      %v3117 = vpop.f32.mrf.mxu0
      %3118 = vmatprep.mubr.f32.mxu0 0.0
      %3119 = vmatmul.mubr.f32.gmra.mxu0 %v2911
      %v3120 = vpop.f32.mrf.mxu0
      %v3121 = vadd.f32 0.0, %v3120
      %v3122 = vpop.f32.mrf.mxu0
      %3123 = vmatprep.mubr.f32.mxu0 0.0
      %3124 = vmatmul.mubr.f32.gmra.mxu0 %v2914
      %v3125 = vpop.f32.mrf.mxu0
      %v3126 = vadd.f32 0.0, %v3125
      %v3127 = vpop.f32.mrf.mxu0
      %3128 = vmatprep.mubr.f32.mxu0 0.0
      %3129 = vmatmul.mubr.f32.gmra.mxu0 %v2917
      %v3130 = vpop.f32.mrf.mxu0
      %v3131 = vadd.f32 0.0, %v3130
      %v3132 = vpop.f32.mrf.mxu0
      %3133 = vmatprep.mubr.f32.mxu0 0.0
      %3134 = vmatmul.mubr.f32.gmra.mxu0 %v2920
      %v3135 = vpop.f32.mrf.mxu0
      %v3136 = vadd.f32 0.0, %v3135
      %v3137 = vpop.f32.mrf.mxu0
      %3138 = vmatprep.mubr.f32.mxu0 0.0
      %3139 = vmatmul.mubr.f32.gmra.mxu0 %v2923
      %v3140 = vpop.f32.mrf.mxu0
      %v3141 = vadd.f32 0.0, %v3140
      %v3142 = vpop.f32.mrf.mxu0
      %3143 = vmatprep.mubr.f32.mxu0 0.0
      %3144 = vmatmul.mubr.f32.gmra.mxu0 %v2926
      %v3145 = vpop.f32.mrf.mxu0
      %v3146 = vadd.f32 0.0, %v3145
      %v3147 = vpop.f32.mrf.mxu0
      %3148 = vmatprep.mubr.f32.mxu0 0.0
      %3149 = vmatmul.mubr.f32.gmra.mxu0 %v2929
      %v3150 = vpop.f32.mrf.mxu0
      %v3151 = vadd.f32 0.0, %v3150
      %v3152 = vpop.f32.mrf.mxu0
      %3153 = vmatprep.mubr.f32.mxu0 0.0
      %3154 = vmatmul.mubr.f32.gmra.mxu0 %v2932
      %v3155 = vpop.f32.mrf.mxu0
      %v3156 = vadd.f32 0.0, %v3155
      %v3157 = vpop.f32.mrf.mxu0
      %3158 = vdwg.mxu0
      %v3159 = vsub.f32 3.1415927, %v255
      %v3160 = vsub.f32 3.1415927, %v256
      %v3161 = vsub.f32 3.1415927, %v257
      %v3162 = vsub.f32 3.1415927, %v258
      %v3163 = vsub.f32 3.1415927, %v259
      %v3164 = vsub.f32 3.1415927, %v260
      %v3165 = vsub.f32 3.1415927, %v261
      %v3166 = vsub.f32 3.1415927, %v262
      %v3167 = vsub.f32 3.1415927, %v263
      %v3168 = vsub.f32 3.1415927, %v264
      %v3169 = vsub.f32 3.1415927, %v265
      %v3170 = vsub.f32 3.1415927, %v266
      %v3171 = vsub.f32 3.1415927, %v267
      %v3172 = vsub.f32 3.1415927, %v268
      %v3173 = vsub.f32 3.1415927, %v269
      %v3174 = vsub.f32 3.1415927, %v270
      %v3175 = vsub.f32 3.1415927, %v271
      %v3176 = vsub.f32 3.1415927, %v272
      %v3177 = vsub.f32 3.1415927, %v273
      %v3178 = vsub.f32 3.1415927, %v274
      %v3179 = vsub.f32 3.1415927, %v275
      %v3180 = vsub.f32 3.1415927, %v276
      %v3181 = vsub.f32 3.1415927, %v277
      %v3182 = vsub.f32 3.1415927, %v278
      %v3183 = vsub.f32 3.1415927, %v279
      %v3184 = vsub.f32 3.1415927, %v280
      %v3185 = vsub.f32 3.1415927, %v281
      %v3186 = vsub.f32 3.1415927, %v282
      %v3187 = vsub.f32 3.1415927, %v283
      %v3188 = vsub.f32 3.1415927, %v284
      %v3189 = vsub.f32 3.1415927, %v285
      %v3190 = vsub.f32 3.1415927, %v286
      %v3191 = vmul.f32 %v255, %v3159
      %v3192 = vmul.f32 %v256, %v3160
      %v3193 = vmul.f32 %v257, %v3161
      %v3194 = vmul.f32 %v258, %v3162
      %v3195 = vmul.f32 %v259, %v3163
      %v3196 = vmul.f32 %v260, %v3164
      %v3197 = vmul.f32 %v261, %v3165
      %v3198 = vmul.f32 %v262, %v3166
      %v3199 = vmul.f32 %v263, %v3167
      %v3200 = vmul.f32 %v264, %v3168
      %v3201 = vmul.f32 %v265, %v3169
      %v3202 = vmul.f32 %v266, %v3170
      %v3203 = vmul.f32 %v267, %v3171
      %v3204 = vmul.f32 %v268, %v3172
      %v3205 = vmul.f32 %v269, %v3173
      %v3206 = vmul.f32 %v270, %v3174
      %v3207 = vmul.f32 %v271, %v3175
      %v3208 = vmul.f32 %v272, %v3176
      %v3209 = vmul.f32 %v273, %v3177
      %v3210 = vmul.f32 %v274, %v3178
      %v3211 = vmul.f32 %v275, %v3179
      %v3212 = vmul.f32 %v276, %v3180
      %v3213 = vmul.f32 %v277, %v3181
      %v3214 = vmul.f32 %v278, %v3182
      %v3215 = vmul.f32 %v279, %v3183
      %v3216 = vmul.f32 %v280, %v3184
      %v3217 = vmul.f32 %v281, %v3185
      %v3218 = vmul.f32 %v282, %v3186
      %v3219 = vmul.f32 %v283, %v3187
      %v3220 = vmul.f32 %v284, %v3188
      %v3221 = vmul.f32 %v285, %v3189
      %v3222 = vmul.f32 %v286, %v3190
      %v3223 = vmul.f32 %v3001, %v3191
      %v3224 = vmul.f32 %v3006, %v3192
      %v3225 = vmul.f32 %v3011, %v3193
      %v3226 = vmul.f32 %v3016, %v3194
      %v3227 = vmul.f32 %v3021, %v3195
      %v3228 = vmul.f32 %v3026, %v3196
      %v3229 = vmul.f32 %v3031, %v3197
      %v3230 = vmul.f32 %v3036, %v3198
      %v3231 = vmul.f32 %v3041, %v3199
      %v3232 = vmul.f32 %v3046, %v3200
      %v3233 = vmul.f32 %v3051, %v3201
      %v3234 = vmul.f32 %v3056, %v3202
      %v3235 = vmul.f32 %v3061, %v3203
      %v3236 = vmul.f32 %v3066, %v3204
      %v3237 = vmul.f32 %v3071, %v3205
      %v3238 = vmul.f32 %v3076, %v3206
      %v3239 = vmul.f32 %v3081, %v3207
      %v3240 = vmul.f32 %v3086, %v3208
      %v3241 = vmul.f32 %v3091, %v3209
      %v3242 = vmul.f32 %v3096, %v3210
      %v3243 = vmul.f32 %v3101, %v3211
      %v3244 = vmul.f32 %v3106, %v3212
      %v3245 = vmul.f32 %v3111, %v3213
      %v3246 = vmul.f32 %v3116, %v3214
      %v3247 = vmul.f32 %v3121, %v3215
      %v3248 = vmul.f32 %v3126, %v3216
      %v3249 = vmul.f32 %v3131, %v3217
      %v3250 = vmul.f32 %v3136, %v3218
      %v3251 = vmul.f32 %v3141, %v3219
      %v3252 = vmul.f32 %v3146, %v3220
      %v3253 = vmul.f32 %v3151, %v3221
      %v3254 = vmul.f32 %v3156, %v3222
      %3255 = vst.msk [vmem:[%s253] sm:$0xff] %vm289, %v3223
      %3256 = vst.msk [vmem:[%s253 + $0x8] sm:$0xff] %vm289, %v3224
      %3257 = vst.msk [vmem:[%s253 + $0x10] sm:$0xff] %vm289, %v3225
      %3258 = vst.msk [vmem:[%s253 + $0x18] sm:$0xff] %vm289, %v3226
      %3259 = vst.msk [vmem:[%s253 + $0x20] sm:$0xff] %vm289, %v3227
      %3260 = vst.msk [vmem:[%s253 + $0x28] sm:$0xff] %vm289, %v3228
      %3261 = vst.msk [vmem:[%s253 + $0x30] sm:$0xff] %vm289, %v3229
      %3262 = vst.msk [vmem:[%s253 + $0x38] sm:$0xff] %vm289, %v3230
      %3263 = vst.msk [vmem:[%s253 + $0x40] sm:$0xff] %vm289, %v3231
      %3264 = vst.msk [vmem:[%s253 + $0x48] sm:$0xff] %vm289, %v3232
      %3265 = vst.msk [vmem:[%s253 + $0x50] sm:$0xff] %vm289, %v3233
      %3266 = vst.msk [vmem:[%s253 + $0x58] sm:$0xff] %vm289, %v3234
      %3267 = vst.msk [vmem:[%s253 + $0x60] sm:$0xff] %vm289, %v3235
      %3268 = vst.msk [vmem:[%s253 + $0x68] sm:$0xff] %vm289, %v3236
      %3269 = vst.msk [vmem:[%s253 + $0x70] sm:$0xff] %vm289, %v3237
      %3270 = vst.msk [vmem:[%s253 + $0x78] sm:$0xff] %vm289, %v3238
      %3271 = vst.msk [vmem:[%s253 + $0x80] sm:$0xff] %vm289, %v3239
      %3272 = vst.msk [vmem:[%s253 + $0x88] sm:$0xff] %vm289, %v3240
      %3273 = vst.msk [vmem:[%s253 + $0x90] sm:$0xff] %vm289, %v3241
      %3274 = vst.msk [vmem:[%s253 + $0x98] sm:$0xff] %vm289, %v3242
      %3275 = vst.msk [vmem:[%s253 + $0xa0] sm:$0xff] %vm289, %v3243
      %3276 = vst.msk [vmem:[%s253 + $0xa8] sm:$0xff] %vm289, %v3244
      %3277 = vst.msk [vmem:[%s253 + $0xb0] sm:$0xff] %vm289, %v3245
      %3278 = vst.msk [vmem:[%s253 + $0xb8] sm:$0xff] %vm289, %v3246
      %3279 = vst.msk [vmem:[%s253 + $0xc0] sm:$0xff] %vm289, %v3247
      %3280 = vst.msk [vmem:[%s253 + $0xc8] sm:$0xff] %vm289, %v3248
      %3281 = vst.msk [vmem:[%s253 + $0xd0] sm:$0xff] %vm289, %v3249
      %3282 = vst.msk [vmem:[%s253 + $0xd8] sm:$0xff] %vm289, %v3250
      %3283 = vst.msk [vmem:[%s253 + $0xe0] sm:$0xff] %vm289, %v3251
      %3284 = vst.msk [vmem:[%s253 + $0xe8] sm:$0xff] %vm289, %v3252
      %3285 = vst.msk [vmem:[%s253 + $0xf0] sm:$0xff] %vm289, %v3253
      %3286 = vst.msk [vmem:[%s253 + $0xf8] sm:$0xff] %vm289, %v3254
      %s3287 = smul.u32 32, %s17
      %p3288 = scmp.lt.s32.totalorder %s3287, 63
      %s3289 = scalar_select %p3288, %s3287, 63
      %s3290 = smul.addr %s3289, 8
      %s3291 = scalar_lea.vmem %s6, %s3290
      // Predicated region
      $region45: #{tpu_custom_call.1} parent=43 // pred_check
        %p3292 = pneg %p166
      $region46: #{tpu_custom_call.1} parent=43 // pred_check_branch
        %3294 = sbr.rel (%p3292) target = $region48
      $region47: #{tpu_custom_call.1} parent=43 // pred_region
        %s3295 = smul.u32 32, %s17
      $region48: #{tpu_custom_call.1} parent=43 // pred_fallthru
        _
    $region44: #{tpu_custom_call.1} parent=5 // pred_fallthru
      _
    %p3296 = scmp.le.s32.totalorder 2, %s12
    // Predicated region
    $region49: #{tpu_custom_call.1} parent=5 // pred_check
      %p3297 = pneg %p3296
    $region50: #{tpu_custom_call.1} parent=5 // pred_check_branch
      %3299 = sbr.rel (%p3297) target = $region52
    $region51: #{tpu_custom_call.1} parent=5 // pred_region
      %s3300 = ssub.s32 %s12, 2
      // Predicated region
      $region53: #{tpu_custom_call.1} parent=51 // pred_check
        %p3301 = pneg %p172
      $region54: #{tpu_custom_call.1} parent=51 // pred_check_branch
        %3303 = sbr.rel (%p3301) target = $region56
      $region55: #{tpu_custom_call.1} parent=51 // pred_region
        %s3304 = smul.u32 32, %s18
        %p3305 = scmp.lt.s32.totalorder %s3304, 63
        %s3306 = scalar_select %p3305, %s3304, 63
        %s3307 = smul.addr %s3306, 8
        %s3308 = scalar_lea.vmem %s6, %s3307
      $region56: #{tpu_custom_call.1} parent=51 // pred_fallthru
        _
    $region52: #{tpu_custom_call.1} parent=5 // pred_fallthru
      _
  $region6: #{tpu_custom_call.1} parent=0 // loop_footer
    %s16 = sadd.s32 1, %s12
  $region7: #{tpu_custom_call.1} parent=0 // loop_footer_branch
    %11 = sbr.rel target = $region3
  $region8: #{tpu_custom_call.1} parent=0 // loop_exit
    _

</llo_original>
